<compile_context>
chip_gen: v5e
topology: v5e:2x2
jax: 0.10.0
libtpu: 0.0.40
codegen_flags: <defaults>
</compile_context>

<pallas_src>
import functools

import jax
import jax.numpy as jnp
from jax.experimental import pallas as pl
from jax.experimental.pallas import tpu as pltpu


# ----------------------------- complex helpers ------------------------------

def _cmul(a, b):
    """Complex multiply on (re, im) tuples of (tb, CL) slabs."""
    ar, ai = a
    br, bi = b
    return ar * br - ai * bi, ar * bi + ai * br


def _cadd(a, b):
    return a[0] + b[0], a[1] + b[1]


def _conj(a):
    return a[0], -a[1]


# --------------------------------- kernel -----------------------------------

def qlayer_multiqubit_kernel(x_ref, wb_ref, theta_ref, rho_ref, out_ref):
    """One batch-tile of the forward pass.

    Lane layout (CL = g*C lanes per slab; g batch rows folded into lanes,
    lane within a slab = b_in*C + c):
      x_ref     : (tb, g*D)     column b_in*D + d          = x[b, d]
      wb_ref    : (g*D, 3*CL)   block-diagonal upload matrix
      theta_ref : (1, 3*CL)     column i*CL + b_in*C + c   = theta[c, i]
      rho_ref   : (tb, 8*CL)    [re00|re01|re10|re11|im00|im01|im10|im11]
      out_ref   : (tb, 8*CL)    same layout as rho_ref
    """
    CL = theta_ref.shape[1] // 3
    K = x_ref.shape[1]

    # phi[:, i*CL + b_in*C + c] = theta[c, i] + sum_d w[c, i, d] * x[b, d]
    if K > 8 and x_ref.shape[0] >= 8:
        # One MXU matmul; its latency hides under the trig below.
        phi = jnp.dot(x_ref[...], wb_ref[...],
                      preferred_element_type=jnp.float32,
                      precision=jax.lax.Precision.HIGHEST) + theta_ref[...]
    else:
        # Tiny contraction: unrolled broadcast-FMA on the VPU.
        x = x_ref[...]
        wb = wb_ref[...]
        phi = x[:, 0:1] * wb[0:1, :]
        for d in range(1, K):
            phi = phi + x[:, d:d + 1] * wb[d:d + 1, :]
        phi = phi + theta_ref[...]

    # Angles as (tb, CL) slabs (lane-contiguous).
    a = phi[:, 0:CL] * 0.5
    b1 = phi[:, CL:2 * CL]
    b2 = phi[:, 2 * CL:3 * CL]
    s = (b1 + b2) * 0.5
    dd = (b1 - b2) * 0.5

    ca, sa = jnp.cos(a), jnp.sin(a)
    cs, ss = jnp.cos(s), jnp.sin(s)
    cd, sd = jnp.cos(dd), jnp.sin(dd)

    # Shared products: U00/U11 share cos(a)e^{±is}, U01/U10 share sin(a)e^{±id}.
    p_re, p_im = ca * cs, ca * ss
    q_re, q_im = sa * cd, sa * sd

    u00 = (p_re, p_im)        #  cos(a) * exp(+i s)
    u01 = (-q_re, -q_im)      # -sin(a) * exp(+i d)
    u10 = (q_re, -q_im)       #  sin(a) * exp(-i d)
    u11 = (p_re, -p_im)       #  cos(a) * exp(-i s)

    # rho entries as (tb, CL) slabs from the single merged input.
    r00 = (rho_ref[:, 0:CL],          rho_ref[:, 4 * CL:5 * CL])
    r01 = (rho_ref[:, CL:2 * CL],     rho_ref[:, 5 * CL:6 * CL])
    r10 = (rho_ref[:, 2 * CL:3 * CL], rho_ref[:, 6 * CL:7 * CL])
    r11 = (rho_ref[:, 3 * CL:4 * CL], rho_ref[:, 7 * CL:8 * CL])

    # T = U @ rho
    t00 = _cadd(_cmul(u00, r00), _cmul(u01, r10))
    t01 = _cadd(_cmul(u00, r01), _cmul(u01, r11))
    t10 = _cadd(_cmul(u10, r00), _cmul(u11, r10))
    t11 = _cadd(_cmul(u10, r01), _cmul(u11, r11))

    # out[i, j] = sum_n T[i, n] * conj(U[j, n])    (U rho U^dagger)
    o00 = _cadd(_cmul(t00, _conj(u00)), _cmul(t01, _conj(u01)))
    o01 = _cadd(_cmul(t00, _conj(u10)), _cmul(t01, _conj(u11)))
    o10 = _cadd(_cmul(t10, _conj(u00)), _cmul(t11, _conj(u01)))
    o11 = _cadd(_cmul(t10, _conj(u10)), _cmul(t11, _conj(u11)))

    # 8 contiguous CL-wide stores; with CL == 128 (the folded common case)
    # every one is a full, 128-lane-aligned unmasked vst.
    out_ref[:, 0:CL] = o00[0]
    out_ref[:, CL:2 * CL] = o01[0]
    out_ref[:, 2 * CL:3 * CL] = o10[0]
    out_ref[:, 3 * CL:4 * CL] = o11[0]
    out_ref[:, 4 * CL:5 * CL] = o00[1]
    out_ref[:, 5 * CL:6 * CL] = o01[1]
    out_ref[:, 6 * CL:7 * CL] = o10[1]
    out_ref[:, 7 * CL:8 * CL] = o11[1]


# ------------------------------ tiling helpers -------------------------------

def _pick_fold(B, C):
    """Fold g batch rows into lanes so each rho-entry slab spans ~128 lanes."""
    target = max(1, 128 // max(C, 1))
    g = min(target, B)
    while g > 1 and B % g != 0:
        g -= 1
    return g


def _pick_tb(n_rows, row_bytes, vmem_budget=24 * 1024 * 1024):
    """Batch tile (in folded rows): as large as the VMEM budget allows (big
    DMAs, amortized grid-step overhead), a multiple of 8, and leaving >= 2 grid
    steps when there is enough work so v7x megacore can split the batch."""
    if n_rows <= 8:
        return n_rows                        # full-dim block is always legal
    cap = max(8, int(vmem_budget // max(row_bytes, 1)))
    if n_rows >= 16:
        cap = min(cap, n_rows // 2)          # >= 2 grid steps for 2 TensorCores
    cap = min(cap, n_rows)
    cap8 = max(8, cap - cap % 8)
    for t in range(cap8, 7, -8):             # prefer an exact divisor: no padding
        if n_rows % t == 0:
            return t
    return cap8                              # caller pads rows up to a multiple


# ---------------------------- packing / unpacking ----------------------------

def _pack_params(w, theta, g):
    """w: (C,3,D), theta: (C,3) -> block-diagonal (g*D, 3*CL) and (1, 3*CL)."""
    C, _, D = w.shape
    CL = g * C
    wt = jnp.transpose(w.astype(jnp.float32), (2, 1, 0))            # (D, 3, C)
    eye = jnp.eye(g, dtype=jnp.float32)
    # wb[b_in*D + d, i*CL + b_in*C + c] = w[c, i, d]
    wb = (eye[:, None, None, :, None] * wt[None, :, :, None, :]).reshape(g * D, 3 * CL)
    theta_b = jnp.broadcast_to(
        jnp.transpose(theta.astype(jnp.float32))[:, None, :], (3, g, C)
    ).reshape(1, 3 * CL)
    return wb, theta_b


def _pack_rho(rho, g):
    """(B, C, 2, 2) complex -> (B//g, 8*g*C) f32, entry-major, re before im."""
    B, C = rho.shape[0], rho.shape[1]
    R = B // g
    rho4 = rho.reshape(B, C, 4)
    full = jnp.stack([jnp.real(rho4), jnp.imag(rho4)], axis=1).astype(jnp.float32)
    full = full.reshape(R, g, 2, C, 4)                     # [o, b_in, part, c, e]
    return jnp.transpose(full, (0, 2, 4, 1, 3)).reshape(R, 8 * g * C)


def _unpack_rho(out_p, g, C):
    """(B//g, 8*g*C) f32 -> (B, C, 2, 2) complex64 (inverse of _pack_rho)."""
    R = out_p.shape[0]
    B = R * g
    o5 = out_p.reshape(R, 2, 4, g, C)                      # [o, part, e, b_in, c]
    o5 = jnp.transpose(o5, (0, 3, 1, 4, 2)).reshape(B, 2, C, 4)
    out = (o5[:, 0] + 1j * o5[:, 1]).astype(jnp.complex64)
    return out.reshape(B, C, 2, 2)


# ------------------------------- entry points --------------------------------

def qlayer_multiqubit_forward_packed(x_f, wb, theta_b, rho_p, *, tb=None):
    """Forward pass on the packed f32 layout (use this between stacked layers
    to avoid the complex<->packed HBM passes around every layer).

    x_f: (R, g*D), wb: (g*D, 3*CL), theta_b: (1, 3*CL), rho_p: (R, 8*CL).
    Returns (R, 8*CL).
    """
    R, width = rho_p.shape
    CL = theta_b.shape[1] // 3
    K = x_f.shape[1]
    assert width == 8 * CL

    if tb is None:
        # Double-buffered x/rho/out blocks plus headroom for the in-kernel
        # (tb, CL) slabs (phi, trig, sandwich intermediates), all f32.
        row_bytes = 8 * K + (128 + 256) * CL
        tb = _pick_tb(R, row_bytes)

    r_pad = -(-R // tb) * tb
    if r_pad != R:
        x_f = jnp.pad(x_f, ((0, r_pad - R), (0, 0)))
        rho_p = jnp.pad(rho_p, ((0, r_pad - R), (0, 0)))

    out_p = pl.pallas_call(
        qlayer_multiqubit_kernel,
        out_shape=jax.ShapeDtypeStruct((r_pad, 8 * CL), jnp.float32),
        grid=(r_pad // tb,),
        in_specs=[
            pl.BlockSpec((tb, K), lambda i: (i, 0)),            # x (folded)
            pl.BlockSpec((K, 3 * CL), lambda i: (0, 0)),        # block-diag W
            pl.BlockSpec((1, 3 * CL), lambda i: (0, 0)),        # theta
            pl.BlockSpec((tb, 8 * CL), lambda i: (i, 0)),       # rho (merged re/im)
        ],
        out_specs=pl.BlockSpec((tb, 8 * CL), lambda i: (i, 0)),
        compiler_params=pltpu.CompilerParams(
            dimension_semantics=("parallel",),
            vmem_limit_bytes=48 * 1024 * 1024),
        # If DMA is still exposed at very small C, pipeline_mode=pl.Buffered(3)
        # on the rho/out specs is a cheap knob to try.
    )(x_f, wb, theta_b, rho_p)
    return out_p[:R] if r_pad != R else out_p


@functools.partial(jax.jit, static_argnames=("tb", "fold"))
def qlayer_multiqubit_forward(rho, x, w, theta, *, tb=None, fold=None):
    """rho: (B,C,2,2) complex64, x: (B,D), w: (C,3,D), theta: (C,3)
    -> (B,C,2,2) complex64 (same semantics as QLayerMultiQubit.forward)."""
    B, D = x.shape
    C = w.shape[0]
    g = _pick_fold(B, C) if fold is None else fold
    assert B % g == 0, "fold factor must divide the batch size"

    wb, theta_b = _pack_params(w, theta, g)
    rho_p = _pack_rho(rho, g)
    x_f = x.astype(jnp.float32).reshape(B // g, g * D)

    out_p = qlayer_multiqubit_forward_packed(x_f, wb, theta_b, rho_p, tb=tb)
    # TODO(synk): the module's optional noise_channels (empty by default) are
    # separate nn.Modules applied after the unitary; they are not part of this
    # kernel.
    return _unpack_rho(out_p, g, C)


# ------------------------------- verification --------------------------------

def _reference_forward(rho, x, w, theta):
    """Plain-JAX re-implementation of the PyTorch forward (for verification)."""
    phi = theta[None, :, :] + jnp.einsum('cij,bj->bci', w, x,
                                         precision=jax.lax.Precision.HIGHEST)
    a = phi[:, :, 0] / 2
    s = (phi[:, :, 1] + phi[:, :, 2]) / 2
    d = (phi[:, :, 1] - phi[:, :, 2]) / 2
    U00 = jnp.cos(a) * jnp.exp(1j * s)
    U01 = -jnp.sin(a) * jnp.exp(1j * d)
    U10 = jnp.sin(a) * jnp.exp(-1j * d)
    U11 = jnp.cos(a) * jnp.exp(-1j * s)
    U = jnp.stack([jnp.stack([U00, U01], -1), jnp.stack([U10, U11], -1)], -2)
    return jnp.einsum('bcim,bcmn,bcjn->bcij', U, rho, jnp.conj(U)).astype(jnp.complex64)


def _make_inputs(key, B, D, C):
    kw, kx, kpr, kpi = jax.random.split(key, 4)
    # Parameters mirroring QLayerMultiQubit.init_parameters(): w ~ N(0, 2/D), theta = 0.
    w = jax.random.normal(kw, (C, 3, D), dtype=jnp.float32) * jnp.sqrt(2.0 / D)
    x = jax.random.normal(kx, (B, D), dtype=jnp.float32)
    # Snap x and w to the bf16 grid so the check below is insensitive to the
    # MXU's f32 rounding mode (all matmul products are then exact in f32).
    w = w.astype(jnp.bfloat16).astype(jnp.float32)
    x = x.astype(jnp.bfloat16).astype(jnp.float32)
    theta = jnp.zeros((C, 3), dtype=jnp.float32)
    # Valid (Hermitian, PSD, trace-1) density matrices rho: (B, C, 2, 2) complex64.
    psi = (jax.random.normal(kpr, (B, C, 2), dtype=jnp.float32)
           + 1j * jax.random.normal(kpi, (B, C, 2), dtype=jnp.float32))
    psi = psi / jnp.linalg.norm(psi, axis=-1, keepdims=True)
    rho = jnp.einsum('bci,bcj->bcij', psi, jnp.conj(psi)).astype(jnp.complex64)
    return rho, x, w, theta


if __name__ == "__main__":
    key = jax.random.PRNGKey(0)
    k1, k2 = jax.random.split(key)

    # Case 1: module defaults (B=8, D=3, C=2); fold capped by B -> g=8, CL=16.
    rho, x, w, theta = _make_inputs(k1, B=8, D=3, C=2)
    out = jax.block_until_ready(qlayer_multiqubit_forward(rho, x, w, theta))
    ref = _reference_forward(rho, x, w, theta)
    assert out.shape == (8, 2, 2, 2) and out.dtype == jnp.complex64
    assert jnp.allclose(out, ref, atol=1e-4, rtol=1e-4), \
        float(jnp.max(jnp.abs(out - ref)))

    # Case 2: lane-dense folded path (g=32, CL=128), MXU phi matmul (K=256) and
    # a 2-step grid so both v7x TensorCores get work.
    rho2, x2, w2, theta2 = _make_inputs(k2, B=512, D=8, C=4)
    out2 = jax.block_until_ready(qlayer_multiqubit_forward(rho2, x2, w2, theta2))
    ref2 = _reference_forward(rho2, x2, w2, theta2)
    assert out2.shape == (512, 4, 2, 2) and out2.dtype == jnp.complex64
    assert jnp.allclose(out2, ref2, atol=1e-4, rtol=1e-4), \
        float(jnp.max(jnp.abs(out2 - ref2)))

    print("KERNEL_OK")
</pallas_src>

<mosaic_0001>
module attributes {stable_mosaic.version = 11 : i64} {
  func.func @qlayer_multiqubit_kernel(%arg0: i32, %arg1: memref<1x24xf32, #tpu.memory_space<vmem>>, %arg2: memref<24x48xf32, #tpu.memory_space<vmem>>, %arg3: memref<1x48xf32, #tpu.memory_space<vmem>>, %arg4: memref<1x128xf32, #tpu.memory_space<vmem>>, %arg5: memref<1x128xf32, #tpu.memory_space<vmem>>) attributes {dimension_semantics = [#tpu.dimension_semantics<parallel>], iteration_bounds = array<i64: 1>, scalar_prefetch = 0 : i64, scratch_operands = 0 : i64, tpu.core_type = #tpu.core_type<tc>, window_params = [{transform_indices = @transform_0, window_bounds = array<i64: 1, 24>}, {pipeline_mode = #tpu.pipeline_mode<synchronous>, transform_indices = @transform_1, window_bounds = array<i64: 24, 48>}, {pipeline_mode = #tpu.pipeline_mode<synchronous>, transform_indices = @transform_2, window_bounds = array<i64: 1, 48>}, {transform_indices = @transform_3, window_bounds = array<i64: 1, 128>}, {transform_indices = @transform_4, window_bounds = array<i64: 1, 128>}]} {
    %c0 = arith.constant 0 : index
    %c0_0 = arith.constant 0 : index
    %0 = vector.load %arg1[%c0, %c0_0] : memref<1x24xf32, #tpu.memory_space<vmem>>, vector<1x24xf32>
    %c0_1 = arith.constant 0 : index
    %c0_2 = arith.constant 0 : index
    %1 = vector.load %arg2[%c0_1, %c0_2] : memref<24x48xf32, #tpu.memory_space<vmem>>, vector<24x48xf32>
    %2 = vector.extract_strided_slice %0 {offsets = [0, 0], sizes = [1, 1], strides = [1, 1]} : vector<1x24xf32> to vector<1x1xf32>
    %3 = vector.extract_strided_slice %1 {offsets = [0, 0], sizes = [1, 48], strides = [1, 1]} : vector<24x48xf32> to vector<1x48xf32>
    %4 = vector.broadcast %2 : vector<1x1xf32> to vector<1x48xf32>
    %5 = arith.mulf %4, %3 : vector<1x48xf32>
    %6 = vector.extract_strided_slice %0 {offsets = [0, 1], sizes = [1, 1], strides = [1, 1]} : vector<1x24xf32> to vector<1x1xf32>
    %7 = vector.extract_strided_slice %1 {offsets = [1, 0], sizes = [1, 48], strides = [1, 1]} : vector<24x48xf32> to vector<1x48xf32>
    %8 = vector.broadcast %6 : vector<1x1xf32> to vector<1x48xf32>
    %9 = arith.mulf %8, %7 : vector<1x48xf32>
    %10 = arith.addf %5, %9 : vector<1x48xf32>
    %11 = vector.extract_strided_slice %0 {offsets = [0, 2], sizes = [1, 1], strides = [1, 1]} : vector<1x24xf32> to vector<1x1xf32>
    %12 = vector.extract_strided_slice %1 {offsets = [2, 0], sizes = [1, 48], strides = [1, 1]} : vector<24x48xf32> to vector<1x48xf32>
    %13 = vector.broadcast %11 : vector<1x1xf32> to vector<1x48xf32>
    %14 = arith.mulf %13, %12 : vector<1x48xf32>
    %15 = arith.addf %10, %14 : vector<1x48xf32>
    %16 = vector.extract_strided_slice %0 {offsets = [0, 3], sizes = [1, 1], strides = [1, 1]} : vector<1x24xf32> to vector<1x1xf32>
    %17 = vector.extract_strided_slice %1 {offsets = [3, 0], sizes = [1, 48], strides = [1, 1]} : vector<24x48xf32> to vector<1x48xf32>
    %18 = vector.broadcast %16 : vector<1x1xf32> to vector<1x48xf32>
    %19 = arith.mulf %18, %17 : vector<1x48xf32>
    %20 = arith.addf %15, %19 : vector<1x48xf32>
    %21 = vector.extract_strided_slice %0 {offsets = [0, 4], sizes = [1, 1], strides = [1, 1]} : vector<1x24xf32> to vector<1x1xf32>
    %22 = vector.extract_strided_slice %1 {offsets = [4, 0], sizes = [1, 48], strides = [1, 1]} : vector<24x48xf32> to vector<1x48xf32>
    %23 = vector.broadcast %21 : vector<1x1xf32> to vector<1x48xf32>
    %24 = arith.mulf %23, %22 : vector<1x48xf32>
    %25 = arith.addf %20, %24 : vector<1x48xf32>
    %26 = vector.extract_strided_slice %0 {offsets = [0, 5], sizes = [1, 1], strides = [1, 1]} : vector<1x24xf32> to vector<1x1xf32>
    %27 = vector.extract_strided_slice %1 {offsets = [5, 0], sizes = [1, 48], strides = [1, 1]} : vector<24x48xf32> to vector<1x48xf32>
    %28 = vector.broadcast %26 : vector<1x1xf32> to vector<1x48xf32>
    %29 = arith.mulf %28, %27 : vector<1x48xf32>
    %30 = arith.addf %25, %29 : vector<1x48xf32>
    %31 = vector.extract_strided_slice %0 {offsets = [0, 6], sizes = [1, 1], strides = [1, 1]} : vector<1x24xf32> to vector<1x1xf32>
    %32 = vector.extract_strided_slice %1 {offsets = [6, 0], sizes = [1, 48], strides = [1, 1]} : vector<24x48xf32> to vector<1x48xf32>
    %33 = vector.broadcast %31 : vector<1x1xf32> to vector<1x48xf32>
    %34 = arith.mulf %33, %32 : vector<1x48xf32>
    %35 = arith.addf %30, %34 : vector<1x48xf32>
    %36 = vector.extract_strided_slice %0 {offsets = [0, 7], sizes = [1, 1], strides = [1, 1]} : vector<1x24xf32> to vector<1x1xf32>
    %37 = vector.extract_strided_slice %1 {offsets = [7, 0], sizes = [1, 48], strides = [1, 1]} : vector<24x48xf32> to vector<1x48xf32>
    %38 = vector.broadcast %36 : vector<1x1xf32> to vector<1x48xf32>
    %39 = arith.mulf %38, %37 : vector<1x48xf32>
    %40 = arith.addf %35, %39 : vector<1x48xf32>
    %41 = vector.extract_strided_slice %0 {offsets = [0, 8], sizes = [1, 1], strides = [1, 1]} : vector<1x24xf32> to vector<1x1xf32>
    %42 = vector.extract_strided_slice %1 {offsets = [8, 0], sizes = [1, 48], strides = [1, 1]} : vector<24x48xf32> to vector<1x48xf32>
    %43 = vector.broadcast %41 : vector<1x1xf32> to vector<1x48xf32>
    %44 = arith.mulf %43, %42 : vector<1x48xf32>
    %45 = arith.addf %40, %44 : vector<1x48xf32>
    %46 = vector.extract_strided_slice %0 {offsets = [0, 9], sizes = [1, 1], strides = [1, 1]} : vector<1x24xf32> to vector<1x1xf32>
    %47 = vector.extract_strided_slice %1 {offsets = [9, 0], sizes = [1, 48], strides = [1, 1]} : vector<24x48xf32> to vector<1x48xf32>
    %48 = vector.broadcast %46 : vector<1x1xf32> to vector<1x48xf32>
    %49 = arith.mulf %48, %47 : vector<1x48xf32>
    %50 = arith.addf %45, %49 : vector<1x48xf32>
    %51 = vector.extract_strided_slice %0 {offsets = [0, 10], sizes = [1, 1], strides = [1, 1]} : vector<1x24xf32> to vector<1x1xf32>
    %52 = vector.extract_strided_slice %1 {offsets = [10, 0], sizes = [1, 48], strides = [1, 1]} : vector<24x48xf32> to vector<1x48xf32>
    %53 = vector.broadcast %51 : vector<1x1xf32> to vector<1x48xf32>
    %54 = arith.mulf %53, %52 : vector<1x48xf32>
    %55 = arith.addf %50, %54 : vector<1x48xf32>
    %56 = vector.extract_strided_slice %0 {offsets = [0, 11], sizes = [1, 1], strides = [1, 1]} : vector<1x24xf32> to vector<1x1xf32>
    %57 = vector.extract_strided_slice %1 {offsets = [11, 0], sizes = [1, 48], strides = [1, 1]} : vector<24x48xf32> to vector<1x48xf32>
    %58 = vector.broadcast %56 : vector<1x1xf32> to vector<1x48xf32>
    %59 = arith.mulf %58, %57 : vector<1x48xf32>
    %60 = arith.addf %55, %59 : vector<1x48xf32>
    %61 = vector.extract_strided_slice %0 {offsets = [0, 12], sizes = [1, 1], strides = [1, 1]} : vector<1x24xf32> to vector<1x1xf32>
    %62 = vector.extract_strided_slice %1 {offsets = [12, 0], sizes = [1, 48], strides = [1, 1]} : vector<24x48xf32> to vector<1x48xf32>
    %63 = vector.broadcast %61 : vector<1x1xf32> to vector<1x48xf32>
    %64 = arith.mulf %63, %62 : vector<1x48xf32>
    %65 = arith.addf %60, %64 : vector<1x48xf32>
    %66 = vector.extract_strided_slice %0 {offsets = [0, 13], sizes = [1, 1], strides = [1, 1]} : vector<1x24xf32> to vector<1x1xf32>
    %67 = vector.extract_strided_slice %1 {offsets = [13, 0], sizes = [1, 48], strides = [1, 1]} : vector<24x48xf32> to vector<1x48xf32>
    %68 = vector.broadcast %66 : vector<1x1xf32> to vector<1x48xf32>
    %69 = arith.mulf %68, %67 : vector<1x48xf32>
    %70 = arith.addf %65, %69 : vector<1x48xf32>
    %71 = vector.extract_strided_slice %0 {offsets = [0, 14], sizes = [1, 1], strides = [1, 1]} : vector<1x24xf32> to vector<1x1xf32>
    %72 = vector.extract_strided_slice %1 {offsets = [14, 0], sizes = [1, 48], strides = [1, 1]} : vector<24x48xf32> to vector<1x48xf32>
    %73 = vector.broadcast %71 : vector<1x1xf32> to vector<1x48xf32>
    %74 = arith.mulf %73, %72 : vector<1x48xf32>
    %75 = arith.addf %70, %74 : vector<1x48xf32>
    %76 = vector.extract_strided_slice %0 {offsets = [0, 15], sizes = [1, 1], strides = [1, 1]} : vector<1x24xf32> to vector<1x1xf32>
    %77 = vector.extract_strided_slice %1 {offsets = [15, 0], sizes = [1, 48], strides = [1, 1]} : vector<24x48xf32> to vector<1x48xf32>
    %78 = vector.broadcast %76 : vector<1x1xf32> to vector<1x48xf32>
    %79 = arith.mulf %78, %77 : vector<1x48xf32>
    %80 = arith.addf %75, %79 : vector<1x48xf32>
    %81 = vector.extract_strided_slice %0 {offsets = [0, 16], sizes = [1, 1], strides = [1, 1]} : vector<1x24xf32> to vector<1x1xf32>
    %82 = vector.extract_strided_slice %1 {offsets = [16, 0], sizes = [1, 48], strides = [1, 1]} : vector<24x48xf32> to vector<1x48xf32>
    %83 = vector.broadcast %81 : vector<1x1xf32> to vector<1x48xf32>
    %84 = arith.mulf %83, %82 : vector<1x48xf32>
    %85 = arith.addf %80, %84 : vector<1x48xf32>
    %86 = vector.extract_strided_slice %0 {offsets = [0, 17], sizes = [1, 1], strides = [1, 1]} : vector<1x24xf32> to vector<1x1xf32>
    %87 = vector.extract_strided_slice %1 {offsets = [17, 0], sizes = [1, 48], strides = [1, 1]} : vector<24x48xf32> to vector<1x48xf32>
    %88 = vector.broadcast %86 : vector<1x1xf32> to vector<1x48xf32>
    %89 = arith.mulf %88, %87 : vector<1x48xf32>
    %90 = arith.addf %85, %89 : vector<1x48xf32>
    %91 = vector.extract_strided_slice %0 {offsets = [0, 18], sizes = [1, 1], strides = [1, 1]} : vector<1x24xf32> to vector<1x1xf32>
    %92 = vector.extract_strided_slice %1 {offsets = [18, 0], sizes = [1, 48], strides = [1, 1]} : vector<24x48xf32> to vector<1x48xf32>
    %93 = vector.broadcast %91 : vector<1x1xf32> to vector<1x48xf32>
    %94 = arith.mulf %93, %92 : vector<1x48xf32>
    %95 = arith.addf %90, %94 : vector<1x48xf32>
    %96 = vector.extract_strided_slice %0 {offsets = [0, 19], sizes = [1, 1], strides = [1, 1]} : vector<1x24xf32> to vector<1x1xf32>
    %97 = vector.extract_strided_slice %1 {offsets = [19, 0], sizes = [1, 48], strides = [1, 1]} : vector<24x48xf32> to vector<1x48xf32>
    %98 = vector.broadcast %96 : vector<1x1xf32> to vector<1x48xf32>
    %99 = arith.mulf %98, %97 : vector<1x48xf32>
    %100 = arith.addf %95, %99 : vector<1x48xf32>
    %101 = vector.extract_strided_slice %0 {offsets = [0, 20], sizes = [1, 1], strides = [1, 1]} : vector<1x24xf32> to vector<1x1xf32>
    %102 = vector.extract_strided_slice %1 {offsets = [20, 0], sizes = [1, 48], strides = [1, 1]} : vector<24x48xf32> to vector<1x48xf32>
    %103 = vector.broadcast %101 : vector<1x1xf32> to vector<1x48xf32>
    %104 = arith.mulf %103, %102 : vector<1x48xf32>
    %105 = arith.addf %100, %104 : vector<1x48xf32>
    %106 = vector.extract_strided_slice %0 {offsets = [0, 21], sizes = [1, 1], strides = [1, 1]} : vector<1x24xf32> to vector<1x1xf32>
    %107 = vector.extract_strided_slice %1 {offsets = [21, 0], sizes = [1, 48], strides = [1, 1]} : vector<24x48xf32> to vector<1x48xf32>
    %108 = vector.broadcast %106 : vector<1x1xf32> to vector<1x48xf32>
    %109 = arith.mulf %108, %107 : vector<1x48xf32>
    %110 = arith.addf %105, %109 : vector<1x48xf32>
    %111 = vector.extract_strided_slice %0 {offsets = [0, 22], sizes = [1, 1], strides = [1, 1]} : vector<1x24xf32> to vector<1x1xf32>
    %112 = vector.extract_strided_slice %1 {offsets = [22, 0], sizes = [1, 48], strides = [1, 1]} : vector<24x48xf32> to vector<1x48xf32>
    %113 = vector.broadcast %111 : vector<1x1xf32> to vector<1x48xf32>
    %114 = arith.mulf %113, %112 : vector<1x48xf32>
    %115 = arith.addf %110, %114 : vector<1x48xf32>
    %116 = vector.extract_strided_slice %0 {offsets = [0, 23], sizes = [1, 1], strides = [1, 1]} : vector<1x24xf32> to vector<1x1xf32>
    %117 = vector.extract_strided_slice %1 {offsets = [23, 0], sizes = [1, 48], strides = [1, 1]} : vector<24x48xf32> to vector<1x48xf32>
    %118 = vector.broadcast %116 : vector<1x1xf32> to vector<1x48xf32>
    %119 = arith.mulf %118, %117 : vector<1x48xf32>
    %120 = arith.addf %115, %119 : vector<1x48xf32>
    %c0_3 = arith.constant 0 : index
    %c0_4 = arith.constant 0 : index
    %121 = vector.load %arg3[%c0_3, %c0_4] : memref<1x48xf32, #tpu.memory_space<vmem>>, vector<1x48xf32>
    %122 = arith.addf %120, %121 : vector<1x48xf32>
    %123 = vector.extract_strided_slice %122 {offsets = [0, 0], sizes = [1, 16], strides = [1, 1]} : vector<1x48xf32> to vector<1x16xf32>
    %cst = arith.constant 5.000000e-01 : f32
    %124 = vector.broadcast %cst : f32 to vector<1x16xf32>
    %125 = arith.mulf %123, %124 : vector<1x16xf32>
    %126 = vector.extract_strided_slice %122 {offsets = [0, 16], sizes = [1, 16], strides = [1, 1]} : vector<1x48xf32> to vector<1x16xf32>
    %127 = vector.extract_strided_slice %122 {offsets = [0, 32], sizes = [1, 16], strides = [1, 1]} : vector<1x48xf32> to vector<1x16xf32>
    %128 = arith.addf %126, %127 : vector<1x16xf32>
    %cst_5 = arith.constant 5.000000e-01 : f32
    %129 = vector.broadcast %cst_5 : f32 to vector<1x16xf32>
    %130 = arith.mulf %128, %129 : vector<1x16xf32>
    %131 = arith.subf %126, %127 : vector<1x16xf32>
    %cst_6 = arith.constant 5.000000e-01 : f32
    %132 = vector.broadcast %cst_6 : f32 to vector<1x16xf32>
    %133 = arith.mulf %131, %132 : vector<1x16xf32>
    %134 = math.cos %125 : vector<1x16xf32>
    %135 = math.sin %125 : vector<1x16xf32>
    %136 = math.cos %130 : vector<1x16xf32>
    %137 = math.sin %130 : vector<1x16xf32>
    %138 = math.cos %133 : vector<1x16xf32>
    %139 = math.sin %133 : vector<1x16xf32>
    %140 = arith.mulf %134, %136 : vector<1x16xf32>
    %141 = arith.mulf %134, %137 : vector<1x16xf32>
    %142 = arith.mulf %135, %138 : vector<1x16xf32>
    %143 = arith.mulf %135, %139 : vector<1x16xf32>
    %cst_7 = arith.constant 0.000000e+00 : f32
    %144 = vector.broadcast %cst_7 : f32 to vector<1x16xf32>
    %145 = arith.subf %144, %142 : vector<1x16xf32>
    %cst_8 = arith.constant 0.000000e+00 : f32
    %146 = vector.broadcast %cst_8 : f32 to vector<1x16xf32>
    %147 = arith.subf %146, %143 : vector<1x16xf32>
    %cst_9 = arith.constant 0.000000e+00 : f32
    %148 = vector.broadcast %cst_9 : f32 to vector<1x16xf32>
    %149 = arith.subf %148, %143 : vector<1x16xf32>
    %cst_10 = arith.constant 0.000000e+00 : f32
    %150 = vector.broadcast %cst_10 : f32 to vector<1x16xf32>
    %151 = arith.subf %150, %141 : vector<1x16xf32>
    %c0_11 = arith.constant 0 : index
    %c0_12 = arith.constant 0 : index
    %152 = vector.load %arg4[%c0_11, %c0_12] : memref<1x128xf32, #tpu.memory_space<vmem>>, vector<1x16xf32>
    %c0_13 = arith.constant 0 : index
    %c64 = arith.constant 64 : index
    %153 = vector.load %arg4[%c0_13, %c64] : memref<1x128xf32, #tpu.memory_space<vmem>>, vector<1x16xf32>
    %c0_14 = arith.constant 0 : index
    %c16 = arith.constant 16 : index
    %154 = vector.load %arg4[%c0_14, %c16] : memref<1x128xf32, #tpu.memory_space<vmem>>, vector<1x16xf32>
    %c0_15 = arith.constant 0 : index
    %c80 = arith.constant 80 : index
    %155 = vector.load %arg4[%c0_15, %c80] : memref<1x128xf32, #tpu.memory_space<vmem>>, vector<1x16xf32>
    %c0_16 = arith.constant 0 : index
    %c32 = arith.constant 32 : index
    %156 = vector.load %arg4[%c0_16, %c32] : memref<1x128xf32, #tpu.memory_space<vmem>>, vector<1x16xf32>
    %c0_17 = arith.constant 0 : index
    %c96 = arith.constant 96 : index
    %157 = vector.load %arg4[%c0_17, %c96] : memref<1x128xf32, #tpu.memory_space<vmem>>, vector<1x16xf32>
    %c0_18 = arith.constant 0 : index
    %c48 = arith.constant 48 : index
    %158 = vector.load %arg4[%c0_18, %c48] : memref<1x128xf32, #tpu.memory_space<vmem>>, vector<1x16xf32>
    %c0_19 = arith.constant 0 : index
    %c112 = arith.constant 112 : index
    %159 = vector.load %arg4[%c0_19, %c112] : memref<1x128xf32, #tpu.memory_space<vmem>>, vector<1x16xf32>
    %160 = arith.mulf %140, %152 : vector<1x16xf32>
    %161 = arith.mulf %141, %153 : vector<1x16xf32>
    %162 = arith.subf %160, %161 : vector<1x16xf32>
    %163 = arith.mulf %140, %153 : vector<1x16xf32>
    %164 = arith.mulf %141, %152 : vector<1x16xf32>
    %165 = arith.addf %163, %164 : vector<1x16xf32>
    %166 = arith.mulf %145, %156 : vector<1x16xf32>
    %167 = arith.mulf %147, %157 : vector<1x16xf32>
    %168 = arith.subf %166, %167 : vector<1x16xf32>
    %169 = arith.mulf %145, %157 : vector<1x16xf32>
    %170 = arith.mulf %147, %156 : vector<1x16xf32>
    %171 = arith.addf %169, %170 : vector<1x16xf32>
    %172 = arith.addf %162, %168 : vector<1x16xf32>
    %173 = arith.addf %165, %171 : vector<1x16xf32>
    %174 = arith.mulf %140, %154 : vector<1x16xf32>
    %175 = arith.mulf %141, %155 : vector<1x16xf32>
    %176 = arith.subf %174, %175 : vector<1x16xf32>
    %177 = arith.mulf %140, %155 : vector<1x16xf32>
    %178 = arith.mulf %141, %154 : vector<1x16xf32>
    %179 = arith.addf %177, %178 : vector<1x16xf32>
    %180 = arith.mulf %145, %158 : vector<1x16xf32>
    %181 = arith.mulf %147, %159 : vector<1x16xf32>
    %182 = arith.subf %180, %181 : vector<1x16xf32>
    %183 = arith.mulf %145, %159 : vector<1x16xf32>
    %184 = arith.mulf %147, %158 : vector<1x16xf32>
    %185 = arith.addf %183, %184 : vector<1x16xf32>
    %186 = arith.addf %176, %182 : vector<1x16xf32>
    %187 = arith.addf %179, %185 : vector<1x16xf32>
    %188 = arith.mulf %142, %152 : vector<1x16xf32>
    %189 = arith.mulf %149, %153 : vector<1x16xf32>
    %190 = arith.subf %188, %189 : vector<1x16xf32>
    %191 = arith.mulf %142, %153 : vector<1x16xf32>
    %192 = arith.mulf %149, %152 : vector<1x16xf32>
    %193 = arith.addf %191, %192 : vector<1x16xf32>
    %194 = arith.mulf %140, %156 : vector<1x16xf32>
    %195 = arith.mulf %151, %157 : vector<1x16xf32>
    %196 = arith.subf %194, %195 : vector<1x16xf32>
    %197 = arith.mulf %140, %157 : vector<1x16xf32>
    %198 = arith.mulf %151, %156 : vector<1x16xf32>
    %199 = arith.addf %197, %198 : vector<1x16xf32>
    %200 = arith.addf %190, %196 : vector<1x16xf32>
    %201 = arith.addf %193, %199 : vector<1x16xf32>
    %202 = arith.mulf %142, %154 : vector<1x16xf32>
    %203 = arith.mulf %149, %155 : vector<1x16xf32>
    %204 = arith.subf %202, %203 : vector<1x16xf32>
    %205 = arith.mulf %142, %155 : vector<1x16xf32>
    %206 = arith.mulf %149, %154 : vector<1x16xf32>
    %207 = arith.addf %205, %206 : vector<1x16xf32>
    %208 = arith.mulf %140, %158 : vector<1x16xf32>
    %209 = arith.mulf %151, %159 : vector<1x16xf32>
    %210 = arith.subf %208, %209 : vector<1x16xf32>
    %211 = arith.mulf %140, %159 : vector<1x16xf32>
    %212 = arith.mulf %151, %158 : vector<1x16xf32>
    %213 = arith.addf %211, %212 : vector<1x16xf32>
    %214 = arith.addf %204, %210 : vector<1x16xf32>
    %215 = arith.addf %207, %213 : vector<1x16xf32>
    %cst_20 = arith.constant 0.000000e+00 : f32
    %216 = vector.broadcast %cst_20 : f32 to vector<1x16xf32>
    %217 = arith.subf %216, %141 : vector<1x16xf32>
    %218 = arith.mulf %172, %140 : vector<1x16xf32>
    %219 = arith.mulf %173, %217 : vector<1x16xf32>
    %220 = arith.subf %218, %219 : vector<1x16xf32>
    %221 = arith.mulf %172, %217 : vector<1x16xf32>
    %222 = arith.mulf %173, %140 : vector<1x16xf32>
    %223 = arith.addf %221, %222 : vector<1x16xf32>
    %cst_21 = arith.constant 0.000000e+00 : f32
    %224 = vector.broadcast %cst_21 : f32 to vector<1x16xf32>
    %225 = arith.subf %224, %147 : vector<1x16xf32>
    %226 = arith.mulf %186, %145 : vector<1x16xf32>
    %227 = arith.mulf %187, %225 : vector<1x16xf32>
    %228 = arith.subf %226, %227 : vector<1x16xf32>
    %229 = arith.mulf %186, %225 : vector<1x16xf32>
    %230 = arith.mulf %187, %145 : vector<1x16xf32>
    %231 = arith.addf %229, %230 : vector<1x16xf32>
    %232 = arith.addf %220, %228 : vector<1x16xf32>
    %233 = arith.addf %223, %231 : vector<1x16xf32>
    %cst_22 = arith.constant 0.000000e+00 : f32
    %234 = vector.broadcast %cst_22 : f32 to vector<1x16xf32>
    %235 = arith.subf %234, %149 : vector<1x16xf32>
    %236 = arith.mulf %172, %142 : vector<1x16xf32>
    %237 = arith.mulf %173, %235 : vector<1x16xf32>
    %238 = arith.subf %236, %237 : vector<1x16xf32>
    %239 = arith.mulf %172, %235 : vector<1x16xf32>
    %240 = arith.mulf %173, %142 : vector<1x16xf32>
    %241 = arith.addf %239, %240 : vector<1x16xf32>
    %cst_23 = arith.constant 0.000000e+00 : f32
    %242 = vector.broadcast %cst_23 : f32 to vector<1x16xf32>
    %243 = arith.subf %242, %151 : vector<1x16xf32>
    %244 = arith.mulf %186, %140 : vector<1x16xf32>
    %245 = arith.mulf %187, %243 : vector<1x16xf32>
    %246 = arith.subf %244, %245 : vector<1x16xf32>
    %247 = arith.mulf %186, %243 : vector<1x16xf32>
    %248 = arith.mulf %187, %140 : vector<1x16xf32>
    %249 = arith.addf %247, %248 : vector<1x16xf32>
    %250 = arith.addf %238, %246 : vector<1x16xf32>
    %251 = arith.addf %241, %249 : vector<1x16xf32>
    %cst_24 = arith.constant 0.000000e+00 : f32
    %252 = vector.broadcast %cst_24 : f32 to vector<1x16xf32>
    %253 = arith.subf %252, %141 : vector<1x16xf32>
    %254 = arith.mulf %200, %140 : vector<1x16xf32>
    %255 = arith.mulf %201, %253 : vector<1x16xf32>
    %256 = arith.subf %254, %255 : vector<1x16xf32>
    %257 = arith.mulf %200, %253 : vector<1x16xf32>
    %258 = arith.mulf %201, %140 : vector<1x16xf32>
    %259 = arith.addf %257, %258 : vector<1x16xf32>
    %cst_25 = arith.constant 0.000000e+00 : f32
    %260 = vector.broadcast %cst_25 : f32 to vector<1x16xf32>
    %261 = arith.subf %260, %147 : vector<1x16xf32>
    %262 = arith.mulf %214, %145 : vector<1x16xf32>
    %263 = arith.mulf %215, %261 : vector<1x16xf32>
    %264 = arith.subf %262, %263 : vector<1x16xf32>
    %265 = arith.mulf %214, %261 : vector<1x16xf32>
    %266 = arith.mulf %215, %145 : vector<1x16xf32>
    %267 = arith.addf %265, %266 : vector<1x16xf32>
    %268 = arith.addf %256, %264 : vector<1x16xf32>
    %269 = arith.addf %259, %267 : vector<1x16xf32>
    %cst_26 = arith.constant 0.000000e+00 : f32
    %270 = vector.broadcast %cst_26 : f32 to vector<1x16xf32>
    %271 = arith.subf %270, %149 : vector<1x16xf32>
    %272 = arith.mulf %200, %142 : vector<1x16xf32>
    %273 = arith.mulf %201, %271 : vector<1x16xf32>
    %274 = arith.subf %272, %273 : vector<1x16xf32>
    %275 = arith.mulf %200, %271 : vector<1x16xf32>
    %276 = arith.mulf %201, %142 : vector<1x16xf32>
    %277 = arith.addf %275, %276 : vector<1x16xf32>
    %cst_27 = arith.constant 0.000000e+00 : f32
    %278 = vector.broadcast %cst_27 : f32 to vector<1x16xf32>
    %279 = arith.subf %278, %151 : vector<1x16xf32>
    %280 = arith.mulf %214, %140 : vector<1x16xf32>
    %281 = arith.mulf %215, %279 : vector<1x16xf32>
    %282 = arith.subf %280, %281 : vector<1x16xf32>
    %283 = arith.mulf %214, %279 : vector<1x16xf32>
    %284 = arith.mulf %215, %140 : vector<1x16xf32>
    %285 = arith.addf %283, %284 : vector<1x16xf32>
    %286 = arith.addf %274, %282 : vector<1x16xf32>
    %287 = arith.addf %277, %285 : vector<1x16xf32>
    %c0_28 = arith.constant 0 : index
    %c0_29 = arith.constant 0 : index
    %288 = vector.load %arg5[%c0_28, %c0_29] : memref<1x128xf32, #tpu.memory_space<vmem>>, vector<1x16xf32>
    tpu.vector_store %arg5[%c0_28, %c0_29], %232 {strides = array<i32>} : memref<1x128xf32, #tpu.memory_space<vmem>>, vector<1x16xf32>,
    %c0_30 = arith.constant 0 : index
    %c16_31 = arith.constant 16 : index
    %289 = vector.load %arg5[%c0_30, %c16_31] : memref<1x128xf32, #tpu.memory_space<vmem>>, vector<1x16xf32>
    tpu.vector_store %arg5[%c0_30, %c16_31], %250 {strides = array<i32>} : memref<1x128xf32, #tpu.memory_space<vmem>>, vector<1x16xf32>,
    %c0_32 = arith.constant 0 : index
    %c32_33 = arith.constant 32 : index
    %290 = vector.load %arg5[%c0_32, %c32_33] : memref<1x128xf32, #tpu.memory_space<vmem>>, vector<1x16xf32>
    tpu.vector_store %arg5[%c0_32, %c32_33], %268 {strides = array<i32>} : memref<1x128xf32, #tpu.memory_space<vmem>>, vector<1x16xf32>,
    %c0_34 = arith.constant 0 : index
    %c48_35 = arith.constant 48 : index
    %291 = vector.load %arg5[%c0_34, %c48_35] : memref<1x128xf32, #tpu.memory_space<vmem>>, vector<1x16xf32>
    tpu.vector_store %arg5[%c0_34, %c48_35], %286 {strides = array<i32>} : memref<1x128xf32, #tpu.memory_space<vmem>>, vector<1x16xf32>,
    %c0_36 = arith.constant 0 : index
    %c64_37 = arith.constant 64 : index
    %292 = vector.load %arg5[%c0_36, %c64_37] : memref<1x128xf32, #tpu.memory_space<vmem>>, vector<1x16xf32>
    tpu.vector_store %arg5[%c0_36, %c64_37], %233 {strides = array<i32>} : memref<1x128xf32, #tpu.memory_space<vmem>>, vector<1x16xf32>,
    %c0_38 = arith.constant 0 : index
    %c80_39 = arith.constant 80 : index
    %293 = vector.load %arg5[%c0_38, %c80_39] : memref<1x128xf32, #tpu.memory_space<vmem>>, vector<1x16xf32>
    tpu.vector_store %arg5[%c0_38, %c80_39], %251 {strides = array<i32>} : memref<1x128xf32, #tpu.memory_space<vmem>>, vector<1x16xf32>,
    %c0_40 = arith.constant 0 : index
    %c96_41 = arith.constant 96 : index
    %294 = vector.load %arg5[%c0_40, %c96_41] : memref<1x128xf32, #tpu.memory_space<vmem>>, vector<1x16xf32>
    tpu.vector_store %arg5[%c0_40, %c96_41], %269 {strides = array<i32>} : memref<1x128xf32, #tpu.memory_space<vmem>>, vector<1x16xf32>,
    %c0_42 = arith.constant 0 : index
    %c112_43 = arith.constant 112 : index
    %295 = vector.load %arg5[%c0_42, %c112_43] : memref<1x128xf32, #tpu.memory_space<vmem>>, vector<1x16xf32>
    tpu.vector_store %arg5[%c0_42, %c112_43], %287 {strides = array<i32>} : memref<1x128xf32, #tpu.memory_space<vmem>>, vector<1x16xf32>,
    return
  }
  func.func @transform_0(%arg0: i32) -> (i32, i32) {
    %c0_i32 = arith.constant 0 : i32
    %c0_i32_0 = arith.constant 0 : i32
    return %arg0, %c0_i32 : i32, i32
  }
  func.func @transform_1(%arg0: i32) -> (i32, i32) {
    %c0_i32 = arith.constant 0 : i32
    %c0_i32_0 = arith.constant 0 : i32
    %c0_i32_1 = arith.constant 0 : i32
    return %c0_i32, %c0_i32_0 : i32, i32
  }
  func.func @transform_2(%arg0: i32) -> (i32, i32) {
    %c0_i32 = arith.constant 0 : i32
    %c0_i32_0 = arith.constant 0 : i32
    %c0_i32_1 = arith.constant 0 : i32
    return %c0_i32, %c0_i32_0 : i32, i32
  }
  func.func @transform_3(%arg0: i32) -> (i32, i32) {
    %c0_i32 = arith.constant 0 : i32
    %c0_i32_0 = arith.constant 0 : i32
    return %arg0, %c0_i32 : i32, i32
  }
  func.func @transform_4(%arg0: i32) -> (i32, i32) {
    %c0_i32 = arith.constant 0 : i32
    %c0_i32_0 = arith.constant 0 : i32
    return %arg0, %c0_i32 : i32, i32
  }
}

</mosaic_0001>

<llo_original>
// kernel: custom-call.1
$region0: #{custom-call.1}
  %s0 = inlined_call_operand.hbm [shape: c64[8,2,2,2], index: 0, kind: input, shape index: {}]
  %s1 = inlined_call_operand.vmem [shape: f32[8,2,2,2], index: 1, kind: output, shape index: {}]
  %s2 = scalar_lea.hbm %s0, 8
  $region1: #{custom-call.1} parent=0
    #allocation0 [shape = 's32[1]{0}', space=sflag, size = 0x4, scoped, tag = 'scoped memory for custom-call.1']
    %3 = vsyncpa [#allocation0], 0
    %s5 = sshll.u32 %s2, 4
    %s6 = int_to_ptr.hbm [resolvable:$true] %s5
    %s7 = sshll.u32 %s1, 4
    %s8 = int_to_ptr.vmem [resolvable:$true] %s7
    %10 = dma.hbm_to_vmem [thread:$0]  %s6, 128, %s8, [#allocation0]
    %12 = dma.done [#allocation0], 128
    %13 = vsyncpa [#allocation0], 1

// kernel: custom-call
$region0: #{custom-call}
  %s0 = inlined_call_operand.hbm [shape: c64[8,2,2,2], index: 0, kind: input, shape index: {}]
  %s1 = inlined_call_operand.vmem [shape: f32[8,2,2,2], index: 1, kind: output, shape index: {}]
  $region1: #{custom-call} parent=0
    #allocation0 [shape = 's32[1]{0}', space=sflag, size = 0x4, scoped, tag = 'scoped memory for custom-call']
    %2 = vsyncpa [#allocation0], 0
    %s4 = sshll.u32 %s0, 4
    %s5 = int_to_ptr.hbm [resolvable:$true] %s4
    %s6 = sshll.u32 %s1, 4
    %s7 = int_to_ptr.vmem [resolvable:$true] %s6
    %9 = dma.hbm_to_vmem [thread:$0]  %s5, 128, %s7, [#allocation0]
    %11 = dma.done [#allocation0], 128
    %12 = vsyncpa [#allocation0], 1

// kernel: custom-call.2
$region0: #{custom-call.2}
  %s0 = inlined_call_operand.vmem [shape: f32[8,2,2,2], index: 0, kind: input, shape index: {}]
  %s1 = inlined_call_operand.vmem [shape: f32[8,2,2,2], index: 1, kind: input, shape index: {}]
  %s2 = inlined_call_operand.hbm [shape: c64[8,2,2,2], index: 2, kind: output, shape index: {}]
  %s3 = scalar_lea.hbm %s2, 8
  $region1: #{custom-call.2} parent=0
    #allocation0 [shape = 's32[1]{0}', space=sflag, size = 0x4, scoped, tag = 'scoped memory for custom-call.2']
    %4 = vsyncpa [#allocation0], 0
    %s6 = sshll.u32 %s0, 4
    %s7 = int_to_ptr.vmem [resolvable:$true] %s6
    %s8 = sshll.u32 %s2, 4
    %s9 = int_to_ptr.hbm [resolvable:$true] %s8
    %11 = dma.vmem_to_hbm [thread:$0]  %s7, 128, %s9, [#allocation0]
    %13 = dma.done [#allocation0], 128
    %14 = vsyncpa [#allocation0], 1
  $region2: #{custom-call.2} parent=0
    #allocation1 [shape = 's32[1]{0}', space=sflag, size = 0x4, scoped, tag = 'scoped memory for custom-call.2']
    %15 = vsyncpa [#allocation1], 0
    %s17 = sshll.u32 %s1, 4
    %s18 = int_to_ptr.vmem [resolvable:$true] %s17
    %s19 = sshll.u32 %s3, 4
    %s20 = int_to_ptr.hbm [resolvable:$true] %s19
    %22 = dma.vmem_to_hbm [thread:$0]  %s18, 128, %s20, [#allocation1]
    %24 = dma.done [#allocation1], 128
    %25 = vsyncpa [#allocation1], 1

// kernel: qlayer_multiqubit_forward.1
$region0: #{qlayer_multiqubit_forward.1}
  #allocation0 [shape = 'u32[]', space=smem, size = 0x4, offset = 0x4, fixed_abs, tag = 'smem constant byte address 0x4 - core index']
  #allocation1 [shape = 'u32[72,128]{1,0:T(1,128)}', space=vmem, size = 0x9000, scoped, tag = 'internal scratch']
  %s0 = inlined_call_operand.vmem [shape: f32[1,24], index: 0, kind: input, shape index: {}]
  %s1 = inlined_call_operand.vmem [shape: f32[24,48], index: 1, kind: input, shape index: {}]
  %s2 = inlined_call_operand.vmem [shape: f32[1,48], index: 2, kind: input, shape index: {}]
  %s3 = inlined_call_operand.vmem [shape: f32[1,128], index: 3, kind: input, shape index: {}]
  %s4 = inlined_call_operand.vmem [shape: f32[1,128], index: 4, kind: output, shape index: {}]
  %s5 = sld [smem:[#allocation0]]
  $region26: #{qlayer_multiqubit_forward.1} parent=0
    _
  %s7 = ssub.s32 1, %s5
  %s8 = scalar_select 0, %s7, %s5
  // Predicated region
  $region2: #{qlayer_multiqubit_forward.1} parent=0 // pred_check
    _
  $region3: #{qlayer_multiqubit_forward.1} parent=0 // pred_check_branch
    %10 = sbr.rel (0) target = $region5
  $region4: #{qlayer_multiqubit_forward.1} parent=0 // pred_region
    _
  $region5: #{qlayer_multiqubit_forward.1} parent=0 // pred_fallthru
    _
  // Predicated region
  $region6: #{qlayer_multiqubit_forward.1} parent=0 // pred_check
    _
  $region7: #{qlayer_multiqubit_forward.1} parent=0 // pred_check_branch
    %12 = sbr.rel (0) target = $region9
  $region8: #{qlayer_multiqubit_forward.1} parent=0 // pred_region
    _
  $region9: #{qlayer_multiqubit_forward.1} parent=0 // pred_fallthru
    _
  // Predicated region
  $region10: #{qlayer_multiqubit_forward.1} parent=0 // pred_check
    _
  $region11: #{qlayer_multiqubit_forward.1} parent=0 // pred_check_branch
    %14 = sbr.rel (0) target = $region13
  $region12: #{qlayer_multiqubit_forward.1} parent=0 // pred_region
    _
  $region13: #{qlayer_multiqubit_forward.1} parent=0 // pred_fallthru
    _
  // Predicated region
  $region14: #{qlayer_multiqubit_forward.1} parent=0 // pred_check
    _
  $region15: #{qlayer_multiqubit_forward.1} parent=0 // pred_check_branch
    %16 = sbr.rel (0) target = $region17
  $region16: #{qlayer_multiqubit_forward.1} parent=0 // pred_region
    _
  $region17: #{qlayer_multiqubit_forward.1} parent=0 // pred_fallthru
    _
  %v17 = vld [vmem:[%s0] sm:$0x1]
  %v18 = vld [vmem:[%s1] sm:$0xff]
  %v19 = vld [vmem:[%s1 + $0x8] sm:$0xff]
  %v20 = vld [vmem:[%s1 + $0x10] sm:$0xff]
  %22 = vset.pattern.permute.xlu0 0
  %23 = vperm.xlu0 %22, %v17
  %v24 = vpop.permute.xlu0 %23
  %v26 = vperm.slane %v24, 0
  %v27 = vmul.f32 %v26, %v18
  %28 = vset.pattern.permute.xlu0 1
  %29 = vperm.xlu0 %28, %v17
  %v30 = vpop.permute.xlu0 %29
  %v32 = vperm.slane %v30, 0
  %v33 = vmul.f32 %v32, %v18
  %v35 = vrot.slane %v33, 1
  %v37 = vadd.f32 %v27, %v35
  %38 = vset.pattern.permute.xlu0 2
  %39 = vperm.xlu0 %38, %v17
  %v40 = vpop.permute.xlu0 %39
  %v42 = vperm.slane %v40, 0
  %v43 = vmul.f32 %v42, %v18
  %v45 = vrot.slane %v43, 2
  %v47 = vadd.f32 %v37, %v45
  %48 = vset.pattern.permute.xlu0 3
  %49 = vperm.xlu0 %48, %v17
  %v50 = vpop.permute.xlu0 %49
  %v52 = vperm.slane %v50, 0
  %v53 = vmul.f32 %v52, %v18
  %v55 = vrot.slane %v53, 3
  %v57 = vadd.f32 %v47, %v55
  %58 = vset.pattern.permute.xlu0 4
  %59 = vperm.xlu0 %58, %v17
  %v60 = vpop.permute.xlu0 %59
  %v62 = vperm.slane %v60, 0
  %v63 = vmul.f32 %v62, %v18
  %v65 = vrot.slane %v63, 4
  %v67 = vadd.f32 %v57, %v65
  %68 = vset.pattern.permute.xlu0 5
  %69 = vperm.xlu0 %68, %v17
  %v70 = vpop.permute.xlu0 %69
  %v72 = vperm.slane %v70, 0
  %v73 = vmul.f32 %v72, %v18
  %v75 = vrot.slane %v73, 5
  %v77 = vadd.f32 %v67, %v75
  %78 = vset.pattern.permute.xlu0 6
  %79 = vperm.xlu0 %78, %v17
  %v80 = vpop.permute.xlu0 %79
  %v82 = vperm.slane %v80, 0
  %v83 = vmul.f32 %v82, %v18
  %v85 = vrot.slane %v83, 6
  %v87 = vadd.f32 %v77, %v85
  %88 = vset.pattern.permute.xlu0 7
  %89 = vperm.xlu0 %88, %v17
  %v90 = vpop.permute.xlu0 %89
  %v92 = vperm.slane %v90, 0
  %v93 = vmul.f32 %v92, %v18
  %v95 = vrot.slane %v93, 7
  %v97 = vadd.f32 %v87, %v95
  %98 = vset.pattern.permute.xlu0 8
  %99 = vperm.xlu0 %98, %v17
  %v100 = vpop.permute.xlu0 %99
  %v102 = vperm.slane %v100, 0
  %v103 = vmul.f32 %v102, %v19
  %v104 = vadd.f32 %v97, %v103
  %105 = vset.pattern.permute.xlu0 9
  %106 = vperm.xlu0 %105, %v17
  %v107 = vpop.permute.xlu0 %106
  %v109 = vperm.slane %v107, 0
  %v110 = vmul.f32 %v109, %v19
  %v112 = vrot.slane %v110, 1
  %v114 = vadd.f32 %v104, %v112
  %115 = vset.pattern.permute.xlu0 10
  %116 = vperm.xlu0 %115, %v17
  %v117 = vpop.permute.xlu0 %116
  %v119 = vperm.slane %v117, 0
  %v120 = vmul.f32 %v119, %v19
  %v122 = vrot.slane %v120, 2
  %v124 = vadd.f32 %v114, %v122
  %125 = vset.pattern.permute.xlu0 11
  %126 = vperm.xlu0 %125, %v17
  %v127 = vpop.permute.xlu0 %126
  %v129 = vperm.slane %v127, 0
  %v130 = vmul.f32 %v129, %v19
  %v132 = vrot.slane %v130, 3
  %v134 = vadd.f32 %v124, %v132
  %135 = vset.pattern.permute.xlu0 12
  %136 = vperm.xlu0 %135, %v17
  %v137 = vpop.permute.xlu0 %136
  %v139 = vperm.slane %v137, 0
  %v140 = vmul.f32 %v139, %v19
  %v142 = vrot.slane %v140, 4
  %v144 = vadd.f32 %v134, %v142
  %145 = vset.pattern.permute.xlu0 13
  %146 = vperm.xlu0 %145, %v17
  %v147 = vpop.permute.xlu0 %146
  %v149 = vperm.slane %v147, 0
  %v150 = vmul.f32 %v149, %v19
  %v152 = vrot.slane %v150, 5
  %v154 = vadd.f32 %v144, %v152
  %155 = vset.pattern.permute.xlu0 14
  %156 = vperm.xlu0 %155, %v17
  %v157 = vpop.permute.xlu0 %156
  %v159 = vperm.slane %v157, 0
  %v160 = vmul.f32 %v159, %v19
  %v162 = vrot.slane %v160, 6
  %v164 = vadd.f32 %v154, %v162
  %165 = vset.pattern.permute.xlu0 15
  %166 = vperm.xlu0 %165, %v17
  %v167 = vpop.permute.xlu0 %166
  %v169 = vperm.slane %v167, 0
  %v170 = vmul.f32 %v169, %v19
  %v172 = vrot.slane %v170, 7
  %v174 = vadd.f32 %v164, %v172
  %175 = vset.pattern.permute.xlu0 16
  %176 = vperm.xlu0 %175, %v17
  %v177 = vpop.permute.xlu0 %176
  %v179 = vperm.slane %v177, 0
  %v180 = vmul.f32 %v179, %v20
  %v181 = vadd.f32 %v174, %v180
  %182 = vset.pattern.permute.xlu0 17
  %183 = vperm.xlu0 %182, %v17
  %v184 = vpop.permute.xlu0 %183
  %v186 = vperm.slane %v184, 0
  %v187 = vmul.f32 %v186, %v20
  %v189 = vrot.slane %v187, 1
  %v191 = vadd.f32 %v181, %v189
  %192 = vset.pattern.permute.xlu0 18
  %193 = vperm.xlu0 %192, %v17
  %v194 = vpop.permute.xlu0 %193
  %v196 = vperm.slane %v194, 0
  %v197 = vmul.f32 %v196, %v20
  %v199 = vrot.slane %v197, 2
  %v201 = vadd.f32 %v191, %v199
  %202 = vset.pattern.permute.xlu0 19
  %203 = vperm.xlu0 %202, %v17
  %v204 = vpop.permute.xlu0 %203
  %v206 = vperm.slane %v204, 0
  %v207 = vmul.f32 %v206, %v20
  %v209 = vrot.slane %v207, 3
  %v211 = vadd.f32 %v201, %v209
  %212 = vset.pattern.permute.xlu0 20
  %213 = vperm.xlu0 %212, %v17
  %v214 = vpop.permute.xlu0 %213
  %v216 = vperm.slane %v214, 0
  %v217 = vmul.f32 %v216, %v20
  %v219 = vrot.slane %v217, 4
  %v221 = vadd.f32 %v211, %v219
  %222 = vset.pattern.permute.xlu0 21
  %223 = vperm.xlu0 %222, %v17
  %v224 = vpop.permute.xlu0 %223
  %v226 = vperm.slane %v224, 0
  %v227 = vmul.f32 %v226, %v20
  %v229 = vrot.slane %v227, 5
  %v231 = vadd.f32 %v221, %v229
  %232 = vset.pattern.permute.xlu0 22
  %233 = vperm.xlu0 %232, %v17
  %v234 = vpop.permute.xlu0 %233
  %v236 = vperm.slane %v234, 0
  %v237 = vmul.f32 %v236, %v20
  %v239 = vrot.slane %v237, 6
  %v241 = vadd.f32 %v231, %v239
  %242 = vset.pattern.permute.xlu0 23
  %243 = vperm.xlu0 %242, %v17
  %v244 = vpop.permute.xlu0 %243
  %v246 = vperm.slane %v244, 0
  %v247 = vmul.f32 %v246, %v20
  %v249 = vrot.slane %v247, 7
  %v251 = vadd.f32 %v241, %v249
  %v252 = vld [vmem:[%s2] sm:$0x1]
  %v253 = vadd.f32 %v251, %v252
  %v254 = vmul.f32 %v253, 0.5
  %256 = vrot.lane.b32.xlu0 %v253, 112
  %v257 = vpop.permute.xlu0 %256
  %v259 = vadd.f32 %v253, %v257
  %v260 = vmul.f32 %v259, 0.5
  %v261 = vsub.f32 %v253, %v257
  %v262 = vmul.f32 %v261, 0.5
  %v263 = vand.u32 2147483647, %v254
  %vm264 = vcmp.le.f32.partialorder %v263, 0.7853982
  %vm265 = vcmp.lt.s32.totalorder %v254, 0
  %v266 = vand.u32 %v254, 2139095040
  %v267 = vshrl.u32 %v266, 23
  %v268 = vsub.s32 %v267, 127
  %v269 = vand.u32 2147483647, %v254
  %v270 = vand.u32 %v269, 8388607
  %v271 = vor.u32 %v270, 8388608
  %v272 = vsub.s32 0, %v271
  %v273 = vadd.s32 %v268, 1
  %vm274 = vcmp.gt.s32.totalorder %v273, 0
  %v275 = vsel %vm274, %v273, 0
  %v276 = vshrl.u32 %v275, 5
  %v277 = vand.u32 %v275, 31
  %v278 = vsub.s32 32, %v277
  %v279 = vshrl.u32 683565275, %v278
  %v280 = vshll.u32 683565275, %v277
  %v281 = vshrl.u32 2475754826, %v278
  %v282 = vor.u32 %v280, %v281
  %v283 = vshll.u32 2475754826, %v277
  %v284 = vshrl.u32 2131351028, %v278
  %v285 = vor.u32 %v283, %v284
  %v286 = vshll.u32 2131351028, %v277
  %v287 = vshrl.u32 2102212464, %v278
  %v288 = vor.u32 %v286, %v287
  %v289 = vshll.u32 2102212464, %v277
  %v290 = vshrl.u32 920167782, %v278
  %v291 = vor.u32 %v289, %v290
  %v292 = vshll.u32 920167782, %v277
  %v293 = vshrl.u32 1326507024, %v278
  %v294 = vor.u32 %v292, %v293
  %vm295 = vcmp.lt.s32.totalorder %v276, 1
  %vm296 = vcmp.lt.s32.totalorder %v276, 2
  %vm297 = vcmp.lt.s32.totalorder %v276, 3
  %vm298 = vcmp.lt.s32.totalorder %v276, 4
  %v299 = vsel %vm295, %v279, %v282
  %v300 = vsel %vm298, %v288, 2102212464
  %v301 = vsel %vm297, %v285, %v300
  %v302 = vsel %vm296, %v299, %v301
  %v303 = vsel %vm295, %v282, %v285
  %v304 = vsel %vm298, %v291, 920167782
  %v305 = vsel %vm297, %v288, %v304
  %v306 = vsel %vm296, %v303, %v305
  %v307 = vsel %vm295, %v285, %v288
  %v308 = vsel %vm298, %v294, 1326507024
  %v309 = vsel %vm297, %v291, %v308
  %v310 = vsel %vm296, %v307, %v309
  %v311 = vshll.u32 %v271, 8
  %v312 = vand.u32 %v311, 65535
  %v313 = vshrl.u32 %v311, 16
  %v314 = vand.u32 %v310, 65535
  %v315 = vshrl.u32 %v310, 16
  %v316 = vmul.u32 %v312, %v314
  %v317 = vmul.u32 %v312, %v315
  %v318 = vmul.u32 %v313, %v314
  %v319 = vmul.u32 %v313, %v315
  %v320 = vshll.u32 %v317, 16
  %v321 = vshrl.u32 %v317, 16
  %v322 = vshll.u32 %v318, 16
  %v323 = vshrl.u32 %v318, 16
  %vm324 = vc.u32 %v316, %v320
  %v325 = vsel %vm324, 1, 0
  %v326 = vadd.s32 %v316, %v320
  %v327 = vadd.s32 %v319, %v325
  %vm328 = vc.u32 %v326, %v322
  %v329 = vsel %vm328, 1, 0
  %v330 = vadd.s32 %v326, %v322
  %v331 = vadd.s32 %v327, %v329
  %v332 = vadd.s32 %v331, %v321
  %v333 = vadd.s32 %v332, %v323
  %v334 = vand.u32 %v311, 65535
  %v335 = vshrl.u32 %v311, 16
  %v336 = vand.u32 %v306, 65535
  %v337 = vshrl.u32 %v306, 16
  %v338 = vmul.u32 %v334, %v336
  %v339 = vmul.u32 %v334, %v337
  %v340 = vmul.u32 %v335, %v336
  %v341 = vmul.u32 %v335, %v337
  %v342 = vshll.u32 %v339, 16
  %v343 = vshrl.u32 %v339, 16
  %v344 = vshll.u32 %v340, 16
  %v345 = vshrl.u32 %v340, 16
  %vm346 = vc.u32 %v338, %v342
  %v347 = vsel %vm346, 1, 0
  %v348 = vadd.s32 %v338, %v342
  %v349 = vadd.s32 %v341, %v347
  %vm350 = vc.u32 %v348, %v344
  %v351 = vsel %vm350, 1, 0
  %v352 = vadd.s32 %v348, %v344
  %v353 = vadd.s32 %v349, %v351
  %v354 = vadd.s32 %v353, %v343
  %v355 = vadd.s32 %v354, %v345
  %v356 = vmul.u32 %v311, %v302
  %v357 = vadd.s32 %v333, %v352
  %vm358 = vc.u32 %v333, %v352
  %v359 = vadd.s32 %v355, 1
  %v360 = vsel %vm358, %v359, %v355
  %v361 = vadd.s32 %v356, %v360
  %v362 = vadd.s32 %v361, 536870912
  %v363 = vshrl.u32 %v362, 30
  %v364 = vshll.u32 %v363, 30
  %v365 = vsub.s32 %v361, %v364
  %vm366 = vcmp.lt.s32.totalorder %v365, 0
  %v367 = vsub.s32 0, %v365
  %v368 = vsel %vm366, %v367, %v365
  %v369 = vclz %v368
  %v370 = vsub.s32 %v369, 2
  %vm371 = vcmp.gt.s32.totalorder 0, %v370
  %v372 = vsel %vm371, 0, %v370
  %v373 = vsub.s32 32, %v372
  %v374 = vshll.u32 %v365, %v372
  %v375 = vshrl.u32 %v357, %v373
  %v376 = vor.u32 %v374, %v375
  %v377 = vsub.s32 4294967266, %v372
  %v378 = vadd.s32 %v377, 127
  %v379 = vshll.u32 %v378, 23
  %v380 = vor.u32 4788187, %v379
  %v381 = vand.u32 2147483647, %v380
  %v383 = vcvt.s32.f32 %v376
  %v384 = vmul.f32 %v383, %v381
  %v385 = vxor.u32 %v384, 2147483648
  %v386 = vsel %vm265, %v385, %v384
  %v387 = vsub.s32 4, %v363
  %v388 = vsel %vm265, %v387, %v363
  %v389 = vsel %vm264, %v254, %v386
  %v390 = vsel %vm264, 0, %v388
  %v391 = vmul.f32 %v389, %v389
  %v392 = vmul.f32 %v391, -0.001358992
  %v393 = vadd.f32 %v392, 0.041655596
  %v394 = vmul.f32 %v391, %v393
  %v395 = vadd.f32 %v394, -0.4999988
  %v396 = vmul.f32 %v391, %v395
  %v397 = vadd.f32 1.0, %v396
  %v398 = vmul.f32 %v389, %v389
  %v399 = vmul.f32 %v398, -0.00019511016
  %v400 = vadd.f32 %v399, 0.008332121
  %v401 = vmul.f32 %v398, %v400
  %v402 = vadd.f32 %v401, -0.16666654
  %v403 = vmul.f32 %v398, %v402
  %v404 = vadd.f32 %v403, 1.0
  %v405 = vmul.f32 %v404, %v389
  %vm406 = vweird.f32 %v254
  %v407 = vand.u32 %v390, 3
  %vm408 = vcmp.lt.s32.totalorder %v407, 2
  %vm409 = vcmp.eq.s32.totalorder %v407, 0
  %v410 = vxor.u32 %v405, 2147483648
  %v411 = vsel %vm409, %v397, %v410
  %vm412 = vcmp.eq.s32.totalorder %v407, 2
  %v413 = vxor.u32 %v397, 2147483648
  %v414 = vsel %vm412, %v413, %v405
  %v415 = vsel %vm408, %v411, %v414
  %v416 = vsel %vm406, nan, %v415
  %v417 = vand.u32 2147483647, %v254
  %vm418 = vcmp.le.f32.partialorder %v417, 0.7853982
  %vm419 = vcmp.lt.s32.totalorder %v254, 0
  %v420 = vand.u32 %v254, 2139095040
  %v421 = vshrl.u32 %v420, 23
  %v422 = vsub.s32 %v421, 127
  %v423 = vand.u32 2147483647, %v254
  %v424 = vand.u32 %v423, 8388607
  %v425 = vor.u32 %v424, 8388608
  %v426 = vsub.s32 0, %v425
  %v427 = vadd.s32 %v422, 1
  %vm428 = vcmp.gt.s32.totalorder %v427, 0
  %v429 = vsel %vm428, %v427, 0
  %v430 = vshrl.u32 %v429, 5
  %v431 = vand.u32 %v429, 31
  %v432 = vsub.s32 32, %v431
  %v433 = vshrl.u32 683565275, %v432
  %v434 = vshll.u32 683565275, %v431
  %v435 = vshrl.u32 2475754826, %v432
  %v436 = vor.u32 %v434, %v435
  %v437 = vshll.u32 2475754826, %v431
  %v438 = vshrl.u32 2131351028, %v432
  %v439 = vor.u32 %v437, %v438
  %v440 = vshll.u32 2131351028, %v431
  %v441 = vshrl.u32 2102212464, %v432
  %v442 = vor.u32 %v440, %v441
  %v443 = vshll.u32 2102212464, %v431
  %v444 = vshrl.u32 920167782, %v432
  %v445 = vor.u32 %v443, %v444
  %v446 = vshll.u32 920167782, %v431
  %v447 = vshrl.u32 1326507024, %v432
  %v448 = vor.u32 %v446, %v447
  %vm449 = vcmp.lt.s32.totalorder %v430, 1
  %vm450 = vcmp.lt.s32.totalorder %v430, 2
  %vm451 = vcmp.lt.s32.totalorder %v430, 3
  %vm452 = vcmp.lt.s32.totalorder %v430, 4
  %v453 = vsel %vm449, %v433, %v436
  %v454 = vsel %vm452, %v442, 2102212464
  %v455 = vsel %vm451, %v439, %v454
  %v456 = vsel %vm450, %v453, %v455
  %v457 = vsel %vm449, %v436, %v439
  %v458 = vsel %vm452, %v445, 920167782
  %v459 = vsel %vm451, %v442, %v458
  %v460 = vsel %vm450, %v457, %v459
  %v461 = vsel %vm449, %v439, %v442
  %v462 = vsel %vm452, %v448, 1326507024
  %v463 = vsel %vm451, %v445, %v462
  %v464 = vsel %vm450, %v461, %v463
  %v465 = vshll.u32 %v425, 8
  %v466 = vand.u32 %v465, 65535
  %v467 = vshrl.u32 %v465, 16
  %v468 = vand.u32 %v464, 65535
  %v469 = vshrl.u32 %v464, 16
  %v470 = vmul.u32 %v466, %v468
  %v471 = vmul.u32 %v466, %v469
  %v472 = vmul.u32 %v467, %v468
  %v473 = vmul.u32 %v467, %v469
  %v474 = vshll.u32 %v471, 16
  %v475 = vshrl.u32 %v471, 16
  %v476 = vshll.u32 %v472, 16
  %v477 = vshrl.u32 %v472, 16
  %vm478 = vc.u32 %v470, %v474
  %v479 = vsel %vm478, 1, 0
  %v480 = vadd.s32 %v470, %v474
  %v481 = vadd.s32 %v473, %v479
  %vm482 = vc.u32 %v480, %v476
  %v483 = vsel %vm482, 1, 0
  %v484 = vadd.s32 %v480, %v476
  %v485 = vadd.s32 %v481, %v483
  %v486 = vadd.s32 %v485, %v475
  %v487 = vadd.s32 %v486, %v477
  %v488 = vand.u32 %v465, 65535
  %v489 = vshrl.u32 %v465, 16
  %v490 = vand.u32 %v460, 65535
  %v491 = vshrl.u32 %v460, 16
  %v492 = vmul.u32 %v488, %v490
  %v493 = vmul.u32 %v488, %v491
  %v494 = vmul.u32 %v489, %v490
  %v495 = vmul.u32 %v489, %v491
  %v496 = vshll.u32 %v493, 16
  %v497 = vshrl.u32 %v493, 16
  %v498 = vshll.u32 %v494, 16
  %v499 = vshrl.u32 %v494, 16
  %vm500 = vc.u32 %v492, %v496
  %v501 = vsel %vm500, 1, 0
  %v502 = vadd.s32 %v492, %v496
  %v503 = vadd.s32 %v495, %v501
  %vm504 = vc.u32 %v502, %v498
  %v505 = vsel %vm504, 1, 0
  %v506 = vadd.s32 %v502, %v498
  %v507 = vadd.s32 %v503, %v505
  %v508 = vadd.s32 %v507, %v497
  %v509 = vadd.s32 %v508, %v499
  %v510 = vmul.u32 %v465, %v456
  %v511 = vadd.s32 %v487, %v506
  %vm512 = vc.u32 %v487, %v506
  %v513 = vadd.s32 %v509, 1
  %v514 = vsel %vm512, %v513, %v509
  %v515 = vadd.s32 %v510, %v514
  %v516 = vadd.s32 %v515, 536870912
  %v517 = vshrl.u32 %v516, 30
  %v518 = vshll.u32 %v517, 30
  %v519 = vsub.s32 %v515, %v518
  %vm520 = vcmp.lt.s32.totalorder %v519, 0
  %v521 = vsub.s32 0, %v519
  %v522 = vsel %vm520, %v521, %v519
  %v523 = vclz %v522
  %v524 = vsub.s32 %v523, 2
  %vm525 = vcmp.gt.s32.totalorder 0, %v524
  %v526 = vsel %vm525, 0, %v524
  %v527 = vsub.s32 32, %v526
  %v528 = vshll.u32 %v519, %v526
  %v529 = vshrl.u32 %v511, %v527
  %v530 = vor.u32 %v528, %v529
  %v531 = vsub.s32 4294967266, %v526
  %v532 = vadd.s32 %v531, 127
  %v533 = vshll.u32 %v532, 23
  %v534 = vor.u32 4788187, %v533
  %v535 = vand.u32 2147483647, %v534
  %v537 = vcvt.s32.f32 %v530
  %v538 = vmul.f32 %v537, %v535
  %v539 = vxor.u32 %v538, 2147483648
  %v540 = vsel %vm419, %v539, %v538
  %v541 = vsub.s32 4, %v517
  %v542 = vsel %vm419, %v541, %v517
  %v543 = vsel %vm418, %v254, %v540
  %v544 = vsel %vm418, 0, %v542
  %v545 = vmul.f32 %v543, %v543
  %v546 = vmul.f32 %v545, -0.001358992
  %v547 = vadd.f32 %v546, 0.041655596
  %v548 = vmul.f32 %v545, %v547
  %v549 = vadd.f32 %v548, -0.4999988
  %v550 = vmul.f32 %v545, %v549
  %v551 = vadd.f32 1.0, %v550
  %v552 = vmul.f32 %v543, %v543
  %v553 = vmul.f32 %v552, -0.00019511016
  %v554 = vadd.f32 %v553, 0.008332121
  %v555 = vmul.f32 %v552, %v554
  %v556 = vadd.f32 %v555, -0.16666654
  %v557 = vmul.f32 %v552, %v556
  %v558 = vadd.f32 %v557, 1.0
  %v559 = vmul.f32 %v558, %v543
  %vm560 = vweird.f32 %v254
  %v561 = vadd.s32 %v544, 3
  %v562 = vand.u32 %v561, 3
  %vm563 = vcmp.lt.s32.totalorder %v562, 2
  %vm564 = vcmp.eq.s32.totalorder %v562, 0
  %v565 = vxor.u32 %v559, 2147483648
  %v566 = vsel %vm564, %v551, %v565
  %vm567 = vcmp.eq.s32.totalorder %v562, 2
  %v568 = vxor.u32 %v551, 2147483648
  %v569 = vsel %vm567, %v568, %v559
  %v570 = vsel %vm563, %v566, %v569
  %v571 = vsel %vm560, nan, %v570
  %v572 = vand.u32 2147483647, %v260
  %vm573 = vcmp.le.f32.partialorder %v572, 0.7853982
  %vm574 = vcmp.lt.s32.totalorder %v260, 0
  %v575 = vand.u32 %v260, 2139095040
  %v576 = vshrl.u32 %v575, 23
  %v577 = vsub.s32 %v576, 127
  %v578 = vand.u32 2147483647, %v260
  %v579 = vand.u32 %v578, 8388607
  %v580 = vor.u32 %v579, 8388608
  %v581 = vsub.s32 0, %v580
  %v582 = vadd.s32 %v577, 1
  %vm583 = vcmp.gt.s32.totalorder %v582, 0
  %v584 = vsel %vm583, %v582, 0
  %v585 = vshrl.u32 %v584, 5
  %v586 = vand.u32 %v584, 31
  %v587 = vsub.s32 32, %v586
  %v588 = vshrl.u32 683565275, %v587
  %v589 = vshll.u32 683565275, %v586
  %v590 = vshrl.u32 2475754826, %v587
  %v591 = vor.u32 %v589, %v590
  %v592 = vshll.u32 2475754826, %v586
  %v593 = vshrl.u32 2131351028, %v587
  %v594 = vor.u32 %v592, %v593
  %v595 = vshll.u32 2131351028, %v586
  %v596 = vshrl.u32 2102212464, %v587
  %v597 = vor.u32 %v595, %v596
  %v598 = vshll.u32 2102212464, %v586
  %v599 = vshrl.u32 920167782, %v587
  %v600 = vor.u32 %v598, %v599
  %v601 = vshll.u32 920167782, %v586
  %v602 = vshrl.u32 1326507024, %v587
  %v603 = vor.u32 %v601, %v602
  %vm604 = vcmp.lt.s32.totalorder %v585, 1
  %vm605 = vcmp.lt.s32.totalorder %v585, 2
  %vm606 = vcmp.lt.s32.totalorder %v585, 3
  %vm607 = vcmp.lt.s32.totalorder %v585, 4
  %v608 = vsel %vm604, %v588, %v591
  %v609 = vsel %vm607, %v597, 2102212464
  %v610 = vsel %vm606, %v594, %v609
  %v611 = vsel %vm605, %v608, %v610
  %v612 = vsel %vm604, %v591, %v594
  %v613 = vsel %vm607, %v600, 920167782
  %v614 = vsel %vm606, %v597, %v613
  %v615 = vsel %vm605, %v612, %v614
  %v616 = vsel %vm604, %v594, %v597
  %v617 = vsel %vm607, %v603, 1326507024
  %v618 = vsel %vm606, %v600, %v617
  %v619 = vsel %vm605, %v616, %v618
  %v620 = vshll.u32 %v580, 8
  %v621 = vand.u32 %v620, 65535
  %v622 = vshrl.u32 %v620, 16
  %v623 = vand.u32 %v619, 65535
  %v624 = vshrl.u32 %v619, 16
  %v625 = vmul.u32 %v621, %v623
  %v626 = vmul.u32 %v621, %v624
  %v627 = vmul.u32 %v622, %v623
  %v628 = vmul.u32 %v622, %v624
  %v629 = vshll.u32 %v626, 16
  %v630 = vshrl.u32 %v626, 16
  %v631 = vshll.u32 %v627, 16
  %v632 = vshrl.u32 %v627, 16
  %vm633 = vc.u32 %v625, %v629
  %v634 = vsel %vm633, 1, 0
  %v635 = vadd.s32 %v625, %v629
  %v636 = vadd.s32 %v628, %v634
  %vm637 = vc.u32 %v635, %v631
  %v638 = vsel %vm637, 1, 0
  %v639 = vadd.s32 %v635, %v631
  %v640 = vadd.s32 %v636, %v638
  %v641 = vadd.s32 %v640, %v630
  %v642 = vadd.s32 %v641, %v632
  %v643 = vand.u32 %v620, 65535
  %v644 = vshrl.u32 %v620, 16
  %v645 = vand.u32 %v615, 65535
  %v646 = vshrl.u32 %v615, 16
  %v647 = vmul.u32 %v643, %v645
  %v648 = vmul.u32 %v643, %v646
  %v649 = vmul.u32 %v644, %v645
  %v650 = vmul.u32 %v644, %v646
  %v651 = vshll.u32 %v648, 16
  %v652 = vshrl.u32 %v648, 16
  %v653 = vshll.u32 %v649, 16
  %v654 = vshrl.u32 %v649, 16
  %vm655 = vc.u32 %v647, %v651
  %v656 = vsel %vm655, 1, 0
  %v657 = vadd.s32 %v647, %v651
  %v658 = vadd.s32 %v650, %v656
  %vm659 = vc.u32 %v657, %v653
  %v660 = vsel %vm659, 1, 0
  %v661 = vadd.s32 %v657, %v653
  %v662 = vadd.s32 %v658, %v660
  %v663 = vadd.s32 %v662, %v652
  %v664 = vadd.s32 %v663, %v654
  %v665 = vmul.u32 %v620, %v611
  %v666 = vadd.s32 %v642, %v661
  %vm667 = vc.u32 %v642, %v661
  %v668 = vadd.s32 %v664, 1
  %v669 = vsel %vm667, %v668, %v664
  %v670 = vadd.s32 %v665, %v669
  %v671 = vadd.s32 %v670, 536870912
  %v672 = vshrl.u32 %v671, 30
  %v673 = vshll.u32 %v672, 30
  %v674 = vsub.s32 %v670, %v673
  %vm675 = vcmp.lt.s32.totalorder %v674, 0
  %v676 = vsub.s32 0, %v674
  %v677 = vsel %vm675, %v676, %v674
  %v678 = vclz %v677
  %v679 = vsub.s32 %v678, 2
  %vm680 = vcmp.gt.s32.totalorder 0, %v679
  %v681 = vsel %vm680, 0, %v679
  %v682 = vsub.s32 32, %v681
  %v683 = vshll.u32 %v674, %v681
  %v684 = vshrl.u32 %v666, %v682
  %v685 = vor.u32 %v683, %v684
  %v686 = vsub.s32 4294967266, %v681
  %v687 = vadd.s32 %v686, 127
  %v688 = vshll.u32 %v687, 23
  %v689 = vor.u32 4788187, %v688
  %v690 = vand.u32 2147483647, %v689
  %v692 = vcvt.s32.f32 %v685
  %v693 = vmul.f32 %v692, %v690
  %v694 = vxor.u32 %v693, 2147483648
  %v695 = vsel %vm574, %v694, %v693
  %v696 = vsub.s32 4, %v672
  %v697 = vsel %vm574, %v696, %v672
  %v698 = vsel %vm573, %v260, %v695
  %v699 = vsel %vm573, 0, %v697
  %v700 = vmul.f32 %v698, %v698
  %v701 = vmul.f32 %v700, -0.001358992
  %v702 = vadd.f32 %v701, 0.041655596
  %v703 = vmul.f32 %v700, %v702
  %v704 = vadd.f32 %v703, -0.4999988
  %v705 = vmul.f32 %v700, %v704
  %v706 = vadd.f32 1.0, %v705
  %v707 = vmul.f32 %v698, %v698
  %v708 = vmul.f32 %v707, -0.00019511016
  %v709 = vadd.f32 %v708, 0.008332121
  %v710 = vmul.f32 %v707, %v709
  %v711 = vadd.f32 %v710, -0.16666654
  %v712 = vmul.f32 %v707, %v711
  %v713 = vadd.f32 %v712, 1.0
  %v714 = vmul.f32 %v713, %v698
  %vm715 = vweird.f32 %v260
  %v716 = vand.u32 %v699, 3
  %vm717 = vcmp.lt.s32.totalorder %v716, 2
  %vm718 = vcmp.eq.s32.totalorder %v716, 0
  %v719 = vxor.u32 %v714, 2147483648
  %v720 = vsel %vm718, %v706, %v719
  %vm721 = vcmp.eq.s32.totalorder %v716, 2
  %v722 = vxor.u32 %v706, 2147483648
  %v723 = vsel %vm721, %v722, %v714
  %v724 = vsel %vm717, %v720, %v723
  %v725 = vsel %vm715, nan, %v724
  %v726 = vand.u32 2147483647, %v260
  %vm727 = vcmp.le.f32.partialorder %v726, 0.7853982
  %vm728 = vcmp.lt.s32.totalorder %v260, 0
  %v729 = vand.u32 %v260, 2139095040
  %v730 = vshrl.u32 %v729, 23
  %v731 = vsub.s32 %v730, 127
  %v732 = vand.u32 2147483647, %v260
  %v733 = vand.u32 %v732, 8388607
  %v734 = vor.u32 %v733, 8388608
  %v735 = vsub.s32 0, %v734
  %v736 = vadd.s32 %v731, 1
  %vm737 = vcmp.gt.s32.totalorder %v736, 0
  %v738 = vsel %vm737, %v736, 0
  %v739 = vshrl.u32 %v738, 5
  %v740 = vand.u32 %v738, 31
  %v741 = vsub.s32 32, %v740
  %v742 = vshrl.u32 683565275, %v741
  %v743 = vshll.u32 683565275, %v740
  %v744 = vshrl.u32 2475754826, %v741
  %v745 = vor.u32 %v743, %v744
  %v746 = vshll.u32 2475754826, %v740
  %v747 = vshrl.u32 2131351028, %v741
  %v748 = vor.u32 %v746, %v747
  %v749 = vshll.u32 2131351028, %v740
  %v750 = vshrl.u32 2102212464, %v741
  %v751 = vor.u32 %v749, %v750
  %v752 = vshll.u32 2102212464, %v740
  %v753 = vshrl.u32 920167782, %v741
  %v754 = vor.u32 %v752, %v753
  %v755 = vshll.u32 920167782, %v740
  %v756 = vshrl.u32 1326507024, %v741
  %v757 = vor.u32 %v755, %v756
  %vm758 = vcmp.lt.s32.totalorder %v739, 1
  %vm759 = vcmp.lt.s32.totalorder %v739, 2
  %vm760 = vcmp.lt.s32.totalorder %v739, 3
  %vm761 = vcmp.lt.s32.totalorder %v739, 4
  %v762 = vsel %vm758, %v742, %v745
  %v763 = vsel %vm761, %v751, 2102212464
  %v764 = vsel %vm760, %v748, %v763
  %v765 = vsel %vm759, %v762, %v764
  %v766 = vsel %vm758, %v745, %v748
  %v767 = vsel %vm761, %v754, 920167782
  %v768 = vsel %vm760, %v751, %v767
  %v769 = vsel %vm759, %v766, %v768
  %v770 = vsel %vm758, %v748, %v751
  %v771 = vsel %vm761, %v757, 1326507024
  %v772 = vsel %vm760, %v754, %v771
  %v773 = vsel %vm759, %v770, %v772
  %v774 = vshll.u32 %v734, 8
  %v775 = vand.u32 %v774, 65535
  %v776 = vshrl.u32 %v774, 16
  %v777 = vand.u32 %v773, 65535
  %v778 = vshrl.u32 %v773, 16
  %v779 = vmul.u32 %v775, %v777
  %v780 = vmul.u32 %v775, %v778
  %v781 = vmul.u32 %v776, %v777
  %v782 = vmul.u32 %v776, %v778
  %v783 = vshll.u32 %v780, 16
  %v784 = vshrl.u32 %v780, 16
  %v785 = vshll.u32 %v781, 16
  %v786 = vshrl.u32 %v781, 16
  %vm787 = vc.u32 %v779, %v783
  %v788 = vsel %vm787, 1, 0
  %v789 = vadd.s32 %v779, %v783
  %v790 = vadd.s32 %v782, %v788
  %vm791 = vc.u32 %v789, %v785
  %v792 = vsel %vm791, 1, 0
  %v793 = vadd.s32 %v789, %v785
  %v794 = vadd.s32 %v790, %v792
  %v795 = vadd.s32 %v794, %v784
  %v796 = vadd.s32 %v795, %v786
  %v797 = vand.u32 %v774, 65535
  %v798 = vshrl.u32 %v774, 16
  %v799 = vand.u32 %v769, 65535
  %v800 = vshrl.u32 %v769, 16
  %v801 = vmul.u32 %v797, %v799
  %v802 = vmul.u32 %v797, %v800
  %v803 = vmul.u32 %v798, %v799
  %v804 = vmul.u32 %v798, %v800
  %v805 = vshll.u32 %v802, 16
  %v806 = vshrl.u32 %v802, 16
  %v807 = vshll.u32 %v803, 16
  %v808 = vshrl.u32 %v803, 16
  %vm809 = vc.u32 %v801, %v805
  %v810 = vsel %vm809, 1, 0
  %v811 = vadd.s32 %v801, %v805
  %v812 = vadd.s32 %v804, %v810
  %vm813 = vc.u32 %v811, %v807
  %v814 = vsel %vm813, 1, 0
  %v815 = vadd.s32 %v811, %v807
  %v816 = vadd.s32 %v812, %v814
  %v817 = vadd.s32 %v816, %v806
  %v818 = vadd.s32 %v817, %v808
  %v819 = vmul.u32 %v774, %v765
  %v820 = vadd.s32 %v796, %v815
  %vm821 = vc.u32 %v796, %v815
  %v822 = vadd.s32 %v818, 1
  %v823 = vsel %vm821, %v822, %v818
  %v824 = vadd.s32 %v819, %v823
  %v825 = vadd.s32 %v824, 536870912
  %v826 = vshrl.u32 %v825, 30
  %v827 = vshll.u32 %v826, 30
  %v828 = vsub.s32 %v824, %v827
  %vm829 = vcmp.lt.s32.totalorder %v828, 0
  %v830 = vsub.s32 0, %v828
  %v831 = vsel %vm829, %v830, %v828
  %v832 = vclz %v831
  %v833 = vsub.s32 %v832, 2
  %vm834 = vcmp.gt.s32.totalorder 0, %v833
  %v835 = vsel %vm834, 0, %v833
  %v836 = vsub.s32 32, %v835
  %v837 = vshll.u32 %v828, %v835
  %v838 = vshrl.u32 %v820, %v836
  %v839 = vor.u32 %v837, %v838
  %v840 = vsub.s32 4294967266, %v835
  %v841 = vadd.s32 %v840, 127
  %v842 = vshll.u32 %v841, 23
  %v843 = vor.u32 4788187, %v842
  %v844 = vand.u32 2147483647, %v843
  %v846 = vcvt.s32.f32 %v839
  %v847 = vmul.f32 %v846, %v844
  %v848 = vxor.u32 %v847, 2147483648
  %v849 = vsel %vm728, %v848, %v847
  %v850 = vsub.s32 4, %v826
  %v851 = vsel %vm728, %v850, %v826
  %v852 = vsel %vm727, %v260, %v849
  %v853 = vsel %vm727, 0, %v851
  %v854 = vmul.f32 %v852, %v852
  %v855 = vmul.f32 %v854, -0.001358992
  %v856 = vadd.f32 %v855, 0.041655596
  %v857 = vmul.f32 %v854, %v856
  %v858 = vadd.f32 %v857, -0.4999988
  %v859 = vmul.f32 %v854, %v858
  %v860 = vadd.f32 1.0, %v859
  %v861 = vmul.f32 %v852, %v852
  %v862 = vmul.f32 %v861, -0.00019511016
  %v863 = vadd.f32 %v862, 0.008332121
  %v864 = vmul.f32 %v861, %v863
  %v865 = vadd.f32 %v864, -0.16666654
  %v866 = vmul.f32 %v861, %v865
  %v867 = vadd.f32 %v866, 1.0
  %v868 = vmul.f32 %v867, %v852
  %vm869 = vweird.f32 %v260
  %v870 = vadd.s32 %v853, 3
  %v871 = vand.u32 %v870, 3
  %vm872 = vcmp.lt.s32.totalorder %v871, 2
  %vm873 = vcmp.eq.s32.totalorder %v871, 0
  %v874 = vxor.u32 %v868, 2147483648
  %v875 = vsel %vm873, %v860, %v874
  %vm876 = vcmp.eq.s32.totalorder %v871, 2
  %v877 = vxor.u32 %v860, 2147483648
  %v878 = vsel %vm876, %v877, %v868
  %v879 = vsel %vm872, %v875, %v878
  %v880 = vsel %vm869, nan, %v879
  %v881 = vand.u32 2147483647, %v262
  %vm882 = vcmp.le.f32.partialorder %v881, 0.7853982
  %vm883 = vcmp.lt.s32.totalorder %v262, 0
  %v884 = vand.u32 %v262, 2139095040
  %v885 = vshrl.u32 %v884, 23
  %v886 = vsub.s32 %v885, 127
  %v887 = vand.u32 2147483647, %v262
  %v888 = vand.u32 %v887, 8388607
  %v889 = vor.u32 %v888, 8388608
  %v890 = vsub.s32 0, %v889
  %v891 = vadd.s32 %v886, 1
  %vm892 = vcmp.gt.s32.totalorder %v891, 0
  %v893 = vsel %vm892, %v891, 0
  %v894 = vshrl.u32 %v893, 5
  %v895 = vand.u32 %v893, 31
  %v896 = vsub.s32 32, %v895
  %v897 = vshrl.u32 683565275, %v896
  %v898 = vshll.u32 683565275, %v895
  %v899 = vshrl.u32 2475754826, %v896
  %v900 = vor.u32 %v898, %v899
  %v901 = vshll.u32 2475754826, %v895
  %v902 = vshrl.u32 2131351028, %v896
  %v903 = vor.u32 %v901, %v902
  %v904 = vshll.u32 2131351028, %v895
  %v905 = vshrl.u32 2102212464, %v896
  %v906 = vor.u32 %v904, %v905
  %v907 = vshll.u32 2102212464, %v895
  %v908 = vshrl.u32 920167782, %v896
  %v909 = vor.u32 %v907, %v908
  %v910 = vshll.u32 920167782, %v895
  %v911 = vshrl.u32 1326507024, %v896
  %v912 = vor.u32 %v910, %v911
  %vm913 = vcmp.lt.s32.totalorder %v894, 1
  %vm914 = vcmp.lt.s32.totalorder %v894, 2
  %vm915 = vcmp.lt.s32.totalorder %v894, 3
  %vm916 = vcmp.lt.s32.totalorder %v894, 4
  %v917 = vsel %vm913, %v897, %v900
  %v918 = vsel %vm916, %v906, 2102212464
  %v919 = vsel %vm915, %v903, %v918
  %v920 = vsel %vm914, %v917, %v919
  %v921 = vsel %vm913, %v900, %v903
  %v922 = vsel %vm916, %v909, 920167782
  %v923 = vsel %vm915, %v906, %v922
  %v924 = vsel %vm914, %v921, %v923
  %v925 = vsel %vm913, %v903, %v906
  %v926 = vsel %vm916, %v912, 1326507024
  %v927 = vsel %vm915, %v909, %v926
  %v928 = vsel %vm914, %v925, %v927
  %v929 = vshll.u32 %v889, 8
  %v930 = vand.u32 %v929, 65535
  %v931 = vshrl.u32 %v929, 16
  %v932 = vand.u32 %v928, 65535
  %v933 = vshrl.u32 %v928, 16
  %v934 = vmul.u32 %v930, %v932
  %v935 = vmul.u32 %v930, %v933
  %v936 = vmul.u32 %v931, %v932
  %v937 = vmul.u32 %v931, %v933
  %v938 = vshll.u32 %v935, 16
  %v939 = vshrl.u32 %v935, 16
  %v940 = vshll.u32 %v936, 16
  %v941 = vshrl.u32 %v936, 16
  %vm942 = vc.u32 %v934, %v938
  %v943 = vsel %vm942, 1, 0
  %v944 = vadd.s32 %v934, %v938
  %v945 = vadd.s32 %v937, %v943
  %vm946 = vc.u32 %v944, %v940
  %v947 = vsel %vm946, 1, 0
  %v948 = vadd.s32 %v944, %v940
  %v949 = vadd.s32 %v945, %v947
  %v950 = vadd.s32 %v949, %v939
  %v951 = vadd.s32 %v950, %v941
  %v952 = vand.u32 %v929, 65535
  %v953 = vshrl.u32 %v929, 16
  %v954 = vand.u32 %v924, 65535
  %v955 = vshrl.u32 %v924, 16
  %v956 = vmul.u32 %v952, %v954
  %v957 = vmul.u32 %v952, %v955
  %v958 = vmul.u32 %v953, %v954
  %v959 = vmul.u32 %v953, %v955
  %v960 = vshll.u32 %v957, 16
  %v961 = vshrl.u32 %v957, 16
  %v962 = vshll.u32 %v958, 16
  %v963 = vshrl.u32 %v958, 16
  %vm964 = vc.u32 %v956, %v960
  %v965 = vsel %vm964, 1, 0
  %v966 = vadd.s32 %v956, %v960
  %v967 = vadd.s32 %v959, %v965
  %vm968 = vc.u32 %v966, %v962
  %v969 = vsel %vm968, 1, 0
  %v970 = vadd.s32 %v966, %v962
  %v971 = vadd.s32 %v967, %v969
  %v972 = vadd.s32 %v971, %v961
  %v973 = vadd.s32 %v972, %v963
  %v974 = vmul.u32 %v929, %v920
  %v975 = vadd.s32 %v951, %v970
  %vm976 = vc.u32 %v951, %v970
  %v977 = vadd.s32 %v973, 1
  %v978 = vsel %vm976, %v977, %v973
  %v979 = vadd.s32 %v974, %v978
  %v980 = vadd.s32 %v979, 536870912
  %v981 = vshrl.u32 %v980, 30
  %v982 = vshll.u32 %v981, 30
  %v983 = vsub.s32 %v979, %v982
  %vm984 = vcmp.lt.s32.totalorder %v983, 0
  %v985 = vsub.s32 0, %v983
  %v986 = vsel %vm984, %v985, %v983
  %v987 = vclz %v986
  %v988 = vsub.s32 %v987, 2
  %vm989 = vcmp.gt.s32.totalorder 0, %v988
  %v990 = vsel %vm989, 0, %v988
  %v991 = vsub.s32 32, %v990
  %v992 = vshll.u32 %v983, %v990
  %v993 = vshrl.u32 %v975, %v991
  %v994 = vor.u32 %v992, %v993
  %v995 = vsub.s32 4294967266, %v990
  %v996 = vadd.s32 %v995, 127
  %v997 = vshll.u32 %v996, 23
  %v998 = vor.u32 4788187, %v997
  %v999 = vand.u32 2147483647, %v998
  %v1001 = vcvt.s32.f32 %v994
  %v1002 = vmul.f32 %v1001, %v999
  %v1003 = vxor.u32 %v1002, 2147483648
  %v1004 = vsel %vm883, %v1003, %v1002
  %v1005 = vsub.s32 4, %v981
  %v1006 = vsel %vm883, %v1005, %v981
  %v1007 = vsel %vm882, %v262, %v1004
  %v1008 = vsel %vm882, 0, %v1006
  %v1009 = vmul.f32 %v1007, %v1007
  %v1010 = vmul.f32 %v1009, -0.001358992
  %v1011 = vadd.f32 %v1010, 0.041655596
  %v1012 = vmul.f32 %v1009, %v1011
  %v1013 = vadd.f32 %v1012, -0.4999988
  %v1014 = vmul.f32 %v1009, %v1013
  %v1015 = vadd.f32 1.0, %v1014
  %v1016 = vmul.f32 %v1007, %v1007
  %v1017 = vmul.f32 %v1016, -0.00019511016
  %v1018 = vadd.f32 %v1017, 0.008332121
  %v1019 = vmul.f32 %v1016, %v1018
  %v1020 = vadd.f32 %v1019, -0.16666654
  %v1021 = vmul.f32 %v1016, %v1020
  %v1022 = vadd.f32 %v1021, 1.0
  %v1023 = vmul.f32 %v1022, %v1007
  %vm1024 = vweird.f32 %v262
  %v1025 = vand.u32 %v1008, 3
  %vm1026 = vcmp.lt.s32.totalorder %v1025, 2
  %vm1027 = vcmp.eq.s32.totalorder %v1025, 0
  %v1028 = vxor.u32 %v1023, 2147483648
  %v1029 = vsel %vm1027, %v1015, %v1028
  %vm1030 = vcmp.eq.s32.totalorder %v1025, 2
  %v1031 = vxor.u32 %v1015, 2147483648
  %v1032 = vsel %vm1030, %v1031, %v1023
  %v1033 = vsel %vm1026, %v1029, %v1032
  %v1034 = vsel %vm1024, nan, %v1033
  %v1035 = vand.u32 2147483647, %v262
  %vm1036 = vcmp.le.f32.partialorder %v1035, 0.7853982
  %vm1037 = vcmp.lt.s32.totalorder %v262, 0
  %v1038 = vand.u32 %v262, 2139095040
  %v1039 = vshrl.u32 %v1038, 23
  %v1040 = vsub.s32 %v1039, 127
  %v1041 = vand.u32 2147483647, %v262
  %v1042 = vand.u32 %v1041, 8388607
  %v1043 = vor.u32 %v1042, 8388608
  %v1044 = vsub.s32 0, %v1043
  %v1045 = vadd.s32 %v1040, 1
  %vm1046 = vcmp.gt.s32.totalorder %v1045, 0
  %v1047 = vsel %vm1046, %v1045, 0
  %v1048 = vshrl.u32 %v1047, 5
  %v1049 = vand.u32 %v1047, 31
  %v1050 = vsub.s32 32, %v1049
  %v1051 = vshrl.u32 683565275, %v1050
  %v1052 = vshll.u32 683565275, %v1049
  %v1053 = vshrl.u32 2475754826, %v1050
  %v1054 = vor.u32 %v1052, %v1053
  %v1055 = vshll.u32 2475754826, %v1049
  %v1056 = vshrl.u32 2131351028, %v1050
  %v1057 = vor.u32 %v1055, %v1056
  %v1058 = vshll.u32 2131351028, %v1049
  %v1059 = vshrl.u32 2102212464, %v1050
  %v1060 = vor.u32 %v1058, %v1059
  %v1061 = vshll.u32 2102212464, %v1049
  %v1062 = vshrl.u32 920167782, %v1050
  %v1063 = vor.u32 %v1061, %v1062
  %v1064 = vshll.u32 920167782, %v1049
  %v1065 = vshrl.u32 1326507024, %v1050
  %v1066 = vor.u32 %v1064, %v1065
  %vm1067 = vcmp.lt.s32.totalorder %v1048, 1
  %vm1068 = vcmp.lt.s32.totalorder %v1048, 2
  %vm1069 = vcmp.lt.s32.totalorder %v1048, 3
  %vm1070 = vcmp.lt.s32.totalorder %v1048, 4
  %v1071 = vsel %vm1067, %v1051, %v1054
  %v1072 = vsel %vm1070, %v1060, 2102212464
  %v1073 = vsel %vm1069, %v1057, %v1072
  %v1074 = vsel %vm1068, %v1071, %v1073
  %v1075 = vsel %vm1067, %v1054, %v1057
  %v1076 = vsel %vm1070, %v1063, 920167782
  %v1077 = vsel %vm1069, %v1060, %v1076
  %v1078 = vsel %vm1068, %v1075, %v1077
  %v1079 = vsel %vm1067, %v1057, %v1060
  %v1080 = vsel %vm1070, %v1066, 1326507024
  %v1081 = vsel %vm1069, %v1063, %v1080
  %v1082 = vsel %vm1068, %v1079, %v1081
  %v1083 = vshll.u32 %v1043, 8
  %v1084 = vand.u32 %v1083, 65535
  %v1085 = vshrl.u32 %v1083, 16
  %v1086 = vand.u32 %v1082, 65535
  %v1087 = vshrl.u32 %v1082, 16
  %v1088 = vmul.u32 %v1084, %v1086
  %v1089 = vmul.u32 %v1084, %v1087
  %v1090 = vmul.u32 %v1085, %v1086
  %v1091 = vmul.u32 %v1085, %v1087
  %v1092 = vshll.u32 %v1089, 16
  %v1093 = vshrl.u32 %v1089, 16
  %v1094 = vshll.u32 %v1090, 16
  %v1095 = vshrl.u32 %v1090, 16
  %vm1096 = vc.u32 %v1088, %v1092
  %v1097 = vsel %vm1096, 1, 0
  %v1098 = vadd.s32 %v1088, %v1092
  %v1099 = vadd.s32 %v1091, %v1097
  %vm1100 = vc.u32 %v1098, %v1094
  %v1101 = vsel %vm1100, 1, 0
  %v1102 = vadd.s32 %v1098, %v1094
  %v1103 = vadd.s32 %v1099, %v1101
  %v1104 = vadd.s32 %v1103, %v1093
  %v1105 = vadd.s32 %v1104, %v1095
  %v1106 = vand.u32 %v1083, 65535
  %v1107 = vshrl.u32 %v1083, 16
  %v1108 = vand.u32 %v1078, 65535
  %v1109 = vshrl.u32 %v1078, 16
  %v1110 = vmul.u32 %v1106, %v1108
  %v1111 = vmul.u32 %v1106, %v1109
  %v1112 = vmul.u32 %v1107, %v1108
  %v1113 = vmul.u32 %v1107, %v1109
  %v1114 = vshll.u32 %v1111, 16
  %v1115 = vshrl.u32 %v1111, 16
  %v1116 = vshll.u32 %v1112, 16
  %v1117 = vshrl.u32 %v1112, 16
  %vm1118 = vc.u32 %v1110, %v1114
  %v1119 = vsel %vm1118, 1, 0
  %v1120 = vadd.s32 %v1110, %v1114
  %v1121 = vadd.s32 %v1113, %v1119
  %vm1122 = vc.u32 %v1120, %v1116
  %v1123 = vsel %vm1122, 1, 0
  %v1124 = vadd.s32 %v1120, %v1116
  %v1125 = vadd.s32 %v1121, %v1123
  %v1126 = vadd.s32 %v1125, %v1115
  %v1127 = vadd.s32 %v1126, %v1117
  %v1128 = vmul.u32 %v1083, %v1074
  %v1129 = vadd.s32 %v1105, %v1124
  %vm1130 = vc.u32 %v1105, %v1124
  %v1131 = vadd.s32 %v1127, 1
  %v1132 = vsel %vm1130, %v1131, %v1127
  %v1133 = vadd.s32 %v1128, %v1132
  %v1134 = vadd.s32 %v1133, 536870912
  %v1135 = vshrl.u32 %v1134, 30
  %v1136 = vshll.u32 %v1135, 30
  %v1137 = vsub.s32 %v1133, %v1136
  %vm1138 = vcmp.lt.s32.totalorder %v1137, 0
  %v1139 = vsub.s32 0, %v1137
  %v1140 = vsel %vm1138, %v1139, %v1137
  %v1141 = vclz %v1140
  %v1142 = vsub.s32 %v1141, 2
  %vm1143 = vcmp.gt.s32.totalorder 0, %v1142
  %v1144 = vsel %vm1143, 0, %v1142
  %v1145 = vsub.s32 32, %v1144
  %v1146 = vshll.u32 %v1137, %v1144
  %v1147 = vshrl.u32 %v1129, %v1145
  %v1148 = vor.u32 %v1146, %v1147
  %v1149 = vsub.s32 4294967266, %v1144
  %v1150 = vadd.s32 %v1149, 127
  %v1151 = vshll.u32 %v1150, 23
  %v1152 = vor.u32 4788187, %v1151
  %v1153 = vand.u32 2147483647, %v1152
  %v1155 = vcvt.s32.f32 %v1148
  %v1156 = vmul.f32 %v1155, %v1153
  %v1157 = vxor.u32 %v1156, 2147483648
  %v1158 = vsel %vm1037, %v1157, %v1156
  %v1159 = vsub.s32 4, %v1135
  %v1160 = vsel %vm1037, %v1159, %v1135
  %v1161 = vsel %vm1036, %v262, %v1158
  %v1162 = vsel %vm1036, 0, %v1160
  %v1163 = vmul.f32 %v1161, %v1161
  %v1164 = vmul.f32 %v1163, -0.001358992
  %v1165 = vadd.f32 %v1164, 0.041655596
  %v1166 = vmul.f32 %v1163, %v1165
  %v1167 = vadd.f32 %v1166, -0.4999988
  %v1168 = vmul.f32 %v1163, %v1167
  %v1169 = vadd.f32 1.0, %v1168
  %v1170 = vmul.f32 %v1161, %v1161
  %v1171 = vmul.f32 %v1170, -0.00019511016
  %v1172 = vadd.f32 %v1171, 0.008332121
  %v1173 = vmul.f32 %v1170, %v1172
  %v1174 = vadd.f32 %v1173, -0.16666654
  %v1175 = vmul.f32 %v1170, %v1174
  %v1176 = vadd.f32 %v1175, 1.0
  %v1177 = vmul.f32 %v1176, %v1161
  %vm1178 = vweird.f32 %v262
  %v1179 = vadd.s32 %v1162, 3
  %v1180 = vand.u32 %v1179, 3
  %vm1181 = vcmp.lt.s32.totalorder %v1180, 2
  %vm1182 = vcmp.eq.s32.totalorder %v1180, 0
  %v1183 = vxor.u32 %v1177, 2147483648
  %v1184 = vsel %vm1182, %v1169, %v1183
  %vm1185 = vcmp.eq.s32.totalorder %v1180, 2
  %v1186 = vxor.u32 %v1169, 2147483648
  %v1187 = vsel %vm1185, %v1186, %v1177
  %v1188 = vsel %vm1181, %v1184, %v1187
  %v1189 = vsel %vm1178, nan, %v1188
  %1191 = vrot.lane.b32.xlu0 %v725, 112
  %v1192 = vpop.permute.xlu0 %1191
  %v1194 = vmul.f32 %v416, %v1192
  %1196 = vrot.lane.b32.xlu0 %v880, 112
  %v1197 = vpop.permute.xlu0 %1196
  %v1199 = vmul.f32 %v416, %v1197
  %1201 = vrot.lane.b32.xlu0 %v1034, 112
  %v1202 = vpop.permute.xlu0 %1201
  %v1204 = vmul.f32 %v571, %v1202
  %1206 = vrot.lane.b32.xlu0 %v1189, 112
  %v1207 = vpop.permute.xlu0 %1206
  %v1209 = vmul.f32 %v571, %v1207
  %v1210 = vsub.f32 0.0, %v1204
  %v1211 = vsub.f32 0.0, %v1209
  %v1212 = vsub.f32 0.0, %v1199
  %v1213 = vld [vmem:[%s3] sm:$0x1]
  %v1214 = vmul.f32 %v1194, %v1213
  %v1216 = vperm.slane %v1213, 0
  %1217 = vrot.lane.b32.xlu0 %v1216, 64
  %v1218 = vpop.permute.xlu0 %1217
  %v1220 = vmul.f32 %v1199, %v1218
  %v1221 = vsub.f32 %v1214, %v1220
  %v1222 = vmul.f32 %v1194, %v1218
  %v1223 = vmul.f32 %v1199, %v1213
  %v1224 = vadd.f32 %v1222, %v1223
  %1225 = vrot.lane.b32.xlu0 %v1216, 96
  %v1226 = vpop.permute.xlu0 %1225
  %v1228 = vmul.f32 %v1210, %v1226
  %1229 = vrot.lane.b32.xlu0 %v1216, 32
  %v1230 = vpop.permute.xlu0 %1229
  %v1232 = vmul.f32 %v1211, %v1230
  %v1233 = vsub.f32 %v1228, %v1232
  %v1234 = vmul.f32 %v1210, %v1230
  %v1235 = vmul.f32 %v1211, %v1226
  %v1236 = vadd.f32 %v1234, %v1235
  %v1237 = vadd.f32 %v1221, %v1233
  %v1238 = vadd.f32 %v1224, %v1236
  %1239 = vrot.lane.b32.xlu0 %v1216, 112
  %v1240 = vpop.permute.xlu0 %1239
  %v1242 = vmul.f32 %v1194, %v1240
  %1243 = vrot.lane.b32.xlu0 %v1216, 48
  %v1244 = vpop.permute.xlu0 %1243
  %v1246 = vmul.f32 %v1199, %v1244
  %v1247 = vsub.f32 %v1242, %v1246
  %v1248 = vmul.f32 %v1194, %v1244
  %v1249 = vmul.f32 %v1199, %v1240
  %v1250 = vadd.f32 %v1248, %v1249
  %1251 = vrot.lane.b32.xlu0 %v1216, 80
  %v1252 = vpop.permute.xlu0 %1251
  %v1254 = vmul.f32 %v1210, %v1252
  %1255 = vrot.lane.b32.xlu0 %v1216, 16
  %v1256 = vpop.permute.xlu0 %1255
  %v1258 = vmul.f32 %v1211, %v1256
  %v1259 = vsub.f32 %v1254, %v1258
  %v1260 = vmul.f32 %v1210, %v1256
  %v1261 = vmul.f32 %v1211, %v1252
  %v1262 = vadd.f32 %v1260, %v1261
  %v1263 = vadd.f32 %v1247, %v1259
  %v1264 = vadd.f32 %v1250, %v1262
  %v1265 = vmul.f32 %v1204, %v1213
  %v1266 = vmul.f32 %v1211, %v1218
  %v1267 = vsub.f32 %v1265, %v1266
  %v1268 = vmul.f32 %v1204, %v1218
  %v1269 = vmul.f32 %v1211, %v1213
  %v1270 = vadd.f32 %v1268, %v1269
  %v1271 = vmul.f32 %v1194, %v1226
  %v1272 = vmul.f32 %v1212, %v1230
  %v1273 = vsub.f32 %v1271, %v1272
  %v1274 = vmul.f32 %v1194, %v1230
  %v1275 = vmul.f32 %v1212, %v1226
  %v1276 = vadd.f32 %v1274, %v1275
  %v1277 = vadd.f32 %v1267, %v1273
  %v1278 = vadd.f32 %v1270, %v1276
  %v1279 = vmul.f32 %v1204, %v1240
  %v1280 = vmul.f32 %v1211, %v1244
  %v1281 = vsub.f32 %v1279, %v1280
  %v1282 = vmul.f32 %v1204, %v1244
  %v1283 = vmul.f32 %v1211, %v1240
  %v1284 = vadd.f32 %v1282, %v1283
  %v1285 = vmul.f32 %v1194, %v1252
  %v1286 = vmul.f32 %v1212, %v1256
  %v1287 = vsub.f32 %v1285, %v1286
  %v1288 = vmul.f32 %v1194, %v1256
  %v1289 = vmul.f32 %v1212, %v1252
  %v1290 = vadd.f32 %v1288, %v1289
  %v1291 = vadd.f32 %v1281, %v1287
  %v1292 = vadd.f32 %v1284, %v1290
  %v1293 = vmul.f32 %v1237, %v1194
  %v1294 = vmul.f32 %v1238, %v1212
  %v1295 = vsub.f32 %v1293, %v1294
  %v1296 = vmul.f32 %v1237, %v1212
  %v1297 = vmul.f32 %v1238, %v1194
  %v1298 = vadd.f32 %v1296, %v1297
  %v1299 = vsub.f32 0.0, %v1211
  %v1300 = vmul.f32 %v1263, %v1210
  %v1301 = vmul.f32 %v1264, %v1299
  %v1302 = vsub.f32 %v1300, %v1301
  %v1303 = vmul.f32 %v1263, %v1299
  %v1304 = vmul.f32 %v1264, %v1210
  %v1305 = vadd.f32 %v1303, %v1304
  %v1306 = vadd.f32 %v1295, %v1302
  %v1307 = vadd.f32 %v1298, %v1305
  %v1308 = vmul.f32 %v1237, %v1204
  %v1309 = vmul.f32 %v1238, %v1299
  %v1310 = vsub.f32 %v1308, %v1309
  %v1311 = vmul.f32 %v1237, %v1299
  %v1312 = vmul.f32 %v1238, %v1204
  %v1313 = vadd.f32 %v1311, %v1312
  %v1314 = vsub.f32 0.0, %v1212
  %v1315 = vmul.f32 %v1263, %v1194
  %v1316 = vmul.f32 %v1264, %v1314
  %v1317 = vsub.f32 %v1315, %v1316
  %v1318 = vmul.f32 %v1263, %v1314
  %v1319 = vmul.f32 %v1264, %v1194
  %v1320 = vadd.f32 %v1318, %v1319
  %v1321 = vadd.f32 %v1310, %v1317
  %v1322 = vadd.f32 %v1313, %v1320
  %v1323 = vmul.f32 %v1277, %v1194
  %v1324 = vmul.f32 %v1278, %v1212
  %v1325 = vsub.f32 %v1323, %v1324
  %v1326 = vmul.f32 %v1277, %v1212
  %v1327 = vmul.f32 %v1278, %v1194
  %v1328 = vadd.f32 %v1326, %v1327
  %v1329 = vmul.f32 %v1291, %v1210
  %v1330 = vmul.f32 %v1292, %v1299
  %v1331 = vsub.f32 %v1329, %v1330
  %v1332 = vmul.f32 %v1291, %v1299
  %v1333 = vmul.f32 %v1292, %v1210
  %v1334 = vadd.f32 %v1332, %v1333
  %v1335 = vadd.f32 %v1325, %v1331
  %v1336 = vadd.f32 %v1328, %v1334
  %v1337 = vmul.f32 %v1277, %v1204
  %v1338 = vmul.f32 %v1278, %v1299
  %v1339 = vsub.f32 %v1337, %v1338
  %v1340 = vmul.f32 %v1277, %v1299
  %v1341 = vmul.f32 %v1278, %v1204
  %v1342 = vadd.f32 %v1340, %v1341
  %v1343 = vmul.f32 %v1291, %v1194
  %v1344 = vmul.f32 %v1292, %v1314
  %v1345 = vsub.f32 %v1343, %v1344
  %v1346 = vmul.f32 %v1291, %v1314
  %v1347 = vmul.f32 %v1292, %v1194
  %v1348 = vadd.f32 %v1346, %v1347
  %v1349 = vadd.f32 %v1339, %v1345
  %v1350 = vadd.f32 %v1342, %v1348
  %vm1351 = vcmask 122880
  %1352 = vst.msk [vmem:[%s4] sm:$0x1] %vm1351, %v1306
  %1354 = vrot.lane.b32.xlu0 %v1321, 16
  %v1355 = vpop.permute.xlu0 %1354
  %vm1357 = vcmask 254080
  %1358 = vst.msk [vmem:[%s4] sm:$0x1] %vm1357, %v1355
  %1360 = vrot.lane.b32.xlu0 %v1335, 32
  %v1361 = vpop.permute.xlu0 %1360
  %vm1363 = vcmask 385280
  %1364 = vst.msk [vmem:[%s4] sm:$0x1] %vm1363, %v1361
  %1366 = vrot.lane.b32.xlu0 %v1349, 48
  %v1367 = vpop.permute.xlu0 %1366
  %vm1369 = vcmask 516480
  %1370 = vst.msk [vmem:[%s4] sm:$0x1] %vm1369, %v1367
  %1372 = vrot.lane.b32.xlu0 %v1307, 64
  %v1373 = vpop.permute.xlu0 %1372
  %vm1375 = vcmask 647680
  %1376 = vst.msk [vmem:[%s4] sm:$0x1] %vm1375, %v1373
  %1378 = vrot.lane.b32.xlu0 %v1322, 80
  %v1379 = vpop.permute.xlu0 %1378
  %vm1381 = vcmask 778880
  %1382 = vst.msk [vmem:[%s4] sm:$0x1] %vm1381, %v1379
  %1384 = vrot.lane.b32.xlu0 %v1336, 96
  %v1385 = vpop.permute.xlu0 %1384
  %vm1387 = vcmask 910080
  %1388 = vst.msk [vmem:[%s4] sm:$0x1] %vm1387, %v1385
  %1390 = vrot.lane.b32.xlu0 %v1350, 112
  %v1391 = vpop.permute.xlu0 %1390
  %vm1393 = vcmask 1041280
  %1394 = vst.msk [vmem:[%s4] sm:$0x1] %vm1393, %v1391
  // Predicated region
  $region18: #{qlayer_multiqubit_forward.1} parent=0 // pred_check
    _
  $region19: #{qlayer_multiqubit_forward.1} parent=0 // pred_check_branch
    %1396 = sbr.rel (0) target = $region21
  $region20: #{qlayer_multiqubit_forward.1} parent=0 // pred_region
    _
  $region21: #{qlayer_multiqubit_forward.1} parent=0 // pred_fallthru
    _
  // Predicated region
  $region22: #{qlayer_multiqubit_forward.1} parent=0 // pred_check
    _
  $region23: #{qlayer_multiqubit_forward.1} parent=0 // pred_check_branch
    %1398 = sbr.rel (0) target = $region25
  $region24: #{qlayer_multiqubit_forward.1} parent=0 // pred_region
    _
  $region25: #{qlayer_multiqubit_forward.1} parent=0 // pred_fallthru
    _

</llo_original>
